<compile_context>
chip_gen: v5e
topology: v5e:2x2
jax: 0.10.0
libtpu: 0.0.40
codegen_flags: <defaults>
</compile_context>

<pallas_src>
import functools
import math

import jax
import jax.numpy as jnp
from jax import lax
from jax.experimental import pallas as pl
from jax.experimental.pallas import tpu as pltpu


def _pad(n, m):
    return ((n + m - 1) // m) * m


def _vmem_limit_bytes(footprint_bytes):
    """Generation-aware VMEM budget with headroom below physical capacity."""
    try:
        cap = pltpu.get_tpu_info().vmem_capacity_bytes
    except Exception:
        cap = 64 * 1024 * 1024          # conservative (v7x-sized) default
    ceiling = int(cap * 0.82)           # ~52 MiB on v7x (64 MiB), ~105 MiB on v5e/v6e (128 MiB)
    want = int(footprint_bytes * 1.5)   # margin for Mosaic internal scratch
    floor = min(32 * 1024 * 1024, ceiling)
    return max(min(want, ceiling), floor)


# --------------------------------------------------------------------------
# Kernel 1: fused q/k/v projection -> head-major outputs (B, n_head, S, hd)
# --------------------------------------------------------------------------
def qkv_proj_kernel(x_ref, wqkv_ref, q_ref, k_ref, v_ref, *, scale, n_head):
    d = x_ref.shape[-1]
    hd = d // n_head
    xt = x_ref[0]                                                          # (TR, D)
    qkv = jnp.dot(xt, wqkv_ref[...], preferred_element_type=jnp.float32)  # (TR, 3D) f32
    # Head split happens here (once per element), not in the flash inner loop.
    for h in range(n_head):
        lo = h * hd
        q_ref[0, h] = (qkv[:, lo:lo + hd] * scale).astype(q_ref.dtype)
        k_ref[0, h] = qkv[:, d + lo:d + lo + hd].astype(k_ref.dtype)
        v_ref[0, h] = qkv[:, 2 * d + lo:2 * d + lo + hd].astype(v_ref.dtype)


# --------------------------------------------------------------------------
# Kernel 2: causal flash attention + fused (per-head) output projection
# --------------------------------------------------------------------------
def flash_attn_kernel(q_ref, k_ref, v_ref, wo_ref, o_ref,
                      m_sc, l_sc, acc_sc, *, n_head):
    tq = q_ref.shape[2]
    tk = k_ref.shape[2]

    qi = pl.program_id(1)
    ki = pl.program_id(2)
    nk = pl.num_programs(2)
    q0 = qi * tq
    k0 = ki * tk

    @pl.when(ki == 0)
    def _init():
        m_sc[...] = jnp.full(m_sc.shape, -jnp.inf, jnp.float32)
        l_sc[...] = jnp.zeros(l_sc.shape, jnp.float32)
        acc_sc[...] = jnp.zeros(acc_sc.shape, jnp.float32)

    def _accumulate(bias):
        for h in range(n_head):                      # static unroll (small n_head)
            qh = q_ref[0, h]                         # (TQ, hd), already scaled
            kh = k_ref[0, h]                         # (TK, hd)
            vh = v_ref[0, h]                         # (TK, hd)
            # QK^T without an explicit transpose (contract last dims).
            s = lax.dot_general(qh, kh, (((1,), (1,)), ((), ())),
                                preferred_element_type=jnp.float32)   # (TQ, TK)
            if bias is not None:
                s = s + bias
            m_prev = m_sc[h]                                          # (TQ, 128)
            m_new = jnp.maximum(m_prev, jnp.max(s, axis=-1, keepdims=True))
            m_new_c = m_new[:, :1]                                    # (TQ, 1)
            alpha = jnp.exp(m_prev[:, :1] - m_new_c)                  # (TQ, 1)
            p = jnp.exp(s - m_new_c)                                  # (TQ, TK)
            l_sc[h] = alpha * l_sc[h] + jnp.sum(p, axis=-1, keepdims=True)
            pv = jnp.dot(p.astype(vh.dtype), vh,
                         preferred_element_type=jnp.float32)          # (TQ, hd)
            acc_sc[h] = alpha * acc_sc[h] + pv
            m_sc[h] = m_new

    in_range = k0 <= q0 + tq - 1          # tile not fully above the causal diagonal
    full_tile = k0 + tk - 1 <= q0         # tile fully below the diagonal: no masking

    @pl.when(in_range & full_tile)
    def _unmasked():
        _accumulate(None)

    @pl.when(in_range & jnp.logical_not(full_tile))
    def _masked():
        row = q0 + lax.broadcasted_iota(jnp.int32, (tq, tk), 0)
        col = k0 + lax.broadcasted_iota(jnp.int32, (tq, tk), 1)
        # Finite additive bias (no -inf/-inf NaN hazard), computed once per tile.
        bias = jnp.where(row >= col, 0.0, -1e30).astype(jnp.float32)
        _accumulate(bias)

    @pl.when(ki == nk - 1)
    def _finalize():
        # Per-head softmax normalization (EUP approx reciprocal) fused with the
        # per-head slice of Wo -- heads are never re-concatenated along lanes.
        y = None
        for h in range(n_head):
            inv_l = pl.reciprocal(l_sc[h][:, :1], approx=True)        # (TQ, 1)
            yh = (acc_sc[h] * inv_l).astype(wo_ref.dtype)             # (TQ, hd)
            part = jnp.dot(yh, wo_ref[h],
                           preferred_element_type=jnp.float32)        # (TQ, D)
            y = part if y is None else y + part
        o_ref[0] = y.astype(o_ref.dtype)


# --------------------------------------------------------------------------
# Wrapper
# --------------------------------------------------------------------------
def causal_self_attention(x, wq, wk, wv, wo, n_head, *, batch_first=True,
                          q_tile=256, kv_tile=256, row_tile=256):
    # q_tile/kv_tile=256 feed the 256-deep MXU on v6e/v7x and reduce K/V passes;
    # on v5e (128-wide MXU, lower HBM BW) kv_tile=128 is already full-width.
    if not batch_first:
        # Projections are per-token, so transposing before is equivalent to the
        # PyTorch q/k/v.transpose(0, 1) after projection.
        x = jnp.swapaxes(x, 0, 1)                     # (S, B, D) -> (B, S, D)

    B, S, D = x.shape
    assert D % n_head == 0
    hd = D // n_head
    scale = 1.0 / math.sqrt(hd)

    TR = min(row_tile, S)
    TQ = min(q_tile, S)
    TK = min(kv_tile, S)
    assert S % TR == 0 and S % TQ == 0 and S % TK == 0, "S must divide tile sizes"

    itemsize = jnp.dtype(x.dtype).itemsize
    wqkv = jnp.concatenate([wq, wk, wv], axis=1)      # (D, 3D) fused projection weight
    wo_h = wo.reshape(n_head, hd, D)                  # head-major output projection

    # ---- kernel 1 builder ---------------------------------------------------
    def _qkv_call(single_buffer_weights):
        wbuf = 1 if single_buffer_weights else 2
        wkwargs = {"pipeline_mode": pl.Buffered(1)} if single_buffer_weights else {}
        footprint = itemsize * (
            wbuf * _pad(D, 8) * _pad(3 * D, 128)                     # fused weight
            + 2 * _pad(TR, 8) * _pad(D, 128)                         # x tiles (dbl-buf)
            + 2 * 3 * n_head * _pad(TR, 8) * _pad(hd, 128))          # q/k/v out tiles
        return pl.pallas_call(
            functools.partial(qkv_proj_kernel, scale=scale, n_head=n_head),
            out_shape=(jax.ShapeDtypeStruct((B, n_head, S, hd), x.dtype),) * 3,
            grid_spec=pltpu.PrefetchScalarGridSpec(
                num_scalar_prefetch=0,
                grid=(B, S // TR),
                in_specs=[
                    pl.BlockSpec((1, TR, D), lambda b, r: (b, r, 0)),           # x rows
                    pl.BlockSpec((D, 3 * D), lambda b, r: (0, 0), **wkwargs),   # Wqkv
                ],
                out_specs=[pl.BlockSpec((1, n_head, TR, hd),
                                        lambda b, r: (b, 0, r, 0))] * 3,
            ),
            compiler_params=pltpu.CompilerParams(
                dimension_semantics=("parallel", "parallel"),
                vmem_limit_bytes=_vmem_limit_bytes(footprint)),
        )

    # ---- kernel 2 builder ---------------------------------------------------
    def _attn_call(single_buffer_weights):
        wbuf = 1 if single_buffer_weights else 2
        wkwargs = {"pipeline_mode": pl.Buffered(1)} if single_buffer_weights else {}

        def kv_index_map(b, qi, ki):
            # Clamp to the last KV block this q-tile can attend to: fully-masked
            # KV tiles reuse the previous block index, so their DMA never runs.
            last = ((qi + 1) * TQ - 1) // TK
            return (b, 0, jnp.minimum(ki, last), 0)

        footprint = (itemsize * (
            wbuf * n_head * _pad(hd, 8) * _pad(D, 128)               # Wo (head-major)
            + 2 * n_head * _pad(TQ, 8) * _pad(hd, 128)               # q tiles
            + 2 * 2 * n_head * _pad(TK, 8) * _pad(hd, 128)           # k + v tiles
            + 2 * _pad(TQ, 8) * _pad(D, 128))                        # output tiles
            + 4 * n_head * _pad(TQ, 8) * (2 * 128 + _pad(hd, 128)))  # f32 scratch

        return pl.pallas_call(
            functools.partial(flash_attn_kernel, n_head=n_head),
            out_shape=jax.ShapeDtypeStruct((B, S, D), x.dtype),
            grid_spec=pltpu.PrefetchScalarGridSpec(
                num_scalar_prefetch=0,
                grid=(B, S // TQ, S // TK),
                in_specs=[
                    pl.BlockSpec((1, n_head, TQ, hd),
                                 lambda b, qi, ki: (b, 0, qi, 0)),               # q
                    pl.BlockSpec((1, n_head, TK, hd), kv_index_map),             # k
                    pl.BlockSpec((1, n_head, TK, hd), kv_index_map),             # v
                    pl.BlockSpec((n_head, hd, D),
                                 lambda b, qi, ki: (0, 0, 0), **wkwargs),        # Wo
                ],
                out_specs=pl.BlockSpec((1, TQ, D), lambda b, qi, ki: (b, qi, 0)),
                scratch_shapes=[
                    pltpu.VMEM((n_head, TQ, 128), jnp.float32),   # running max (lane-bcast)
                    pltpu.VMEM((n_head, TQ, 128), jnp.float32),   # running denom
                    pltpu.VMEM((n_head, TQ, hd), jnp.float32),    # head-major accumulator
                ],
            ),
            compiler_params=pltpu.CompilerParams(
                dimension_semantics=("parallel", "parallel", "arbitrary"),
                vmem_limit_bytes=_vmem_limit_bytes(footprint)),
        )

    # ---- run (fall back to default double-buffered weights if Buffered(1)
    #       is rejected by this runtime) -------------------------------------
    try:
        q, k, v = _qkv_call(True)(x, wqkv)
    except Exception:
        q, k, v = _qkv_call(False)(x, wqkv)
    try:
        y = _attn_call(True)(q, k, v, wo_h)
    except Exception:
        y = _attn_call(False)(q, k, v, wo_h)

    if not batch_first:
        y = jnp.swapaxes(y, 0, 1)                     # back to (S, B, D)
    return y


# --------------------------------------------------------------------------
# Pure-JAX reference mirroring the PyTorch module (eval mode)
# --------------------------------------------------------------------------
def reference_attention(x, wq, wk, wv, wo, n_head, batch_first=True):
    q = x @ wq
    k = x @ wk
    v = x @ wv
    if not batch_first:
        q = jnp.swapaxes(q, 0, 1)
        k = jnp.swapaxes(k, 0, 1)
        v = jnp.swapaxes(v, 0, 1)
    b, s, d = q.shape
    hd = d // n_head
    q = q.reshape(b, s, n_head, hd).transpose(0, 2, 1, 3)
    k = k.reshape(b, s, n_head, hd).transpose(0, 2, 1, 3)
    v = v.reshape(b, s, n_head, hd).transpose(0, 2, 1, 3)
    scores = jnp.einsum('bhqd,bhkd->bhqk', q, k) / math.sqrt(hd)
    mask = jnp.tril(jnp.ones((s, s), bool))
    scores = jnp.where(mask, scores, -jnp.inf)
    p = jax.nn.softmax(scores, axis=-1)
    y = jnp.einsum('bhqk,bhkd->bhqd', p, v).transpose(0, 2, 1, 3).reshape(b, s, d)
    y = y @ wo
    if not batch_first:
        y = jnp.swapaxes(y, 0, 1)
    return y


if __name__ == "__main__":
    B, S, D, H = 2, 8, 32, 4

    key = jax.random.PRNGKey(0)
    ks = jax.random.split(key, 5)
    init = lambda k, shape: (0.1 * jax.random.normal(k, shape)).astype(jnp.float32)

    wq = init(ks[0], (D, D))
    wk = init(ks[1], (D, D))
    wv = init(ks[2], (D, D))
    wo = init(ks[3], (D, D))
    x = jax.random.normal(ks[4], (B, S, D), dtype=jnp.float32)

    # batch_first=True path
    out = jax.block_until_ready(
        causal_self_attention(x, wq, wk, wv, wo, H, batch_first=True))
    ref = reference_attention(x, wq, wk, wv, wo, H, batch_first=True)
    assert out.shape == (B, S, D)
    # Tolerance accounts for the EUP approximate reciprocal in the softmax.
    assert jnp.allclose(out, ref, atol=2e-3, rtol=2e-3), \
        f"mismatch vs reference (max abs err {float(jnp.max(jnp.abs(out - ref)))})"

    # batch_first=False path: input is (S, B, D)
    x_sbd = jnp.swapaxes(x, 0, 1)
    out2 = jax.block_until_ready(
        causal_self_attention(x_sbd, wq, wk, wv, wo, H, batch_first=False))
    ref2 = reference_attention(x_sbd, wq, wk, wv, wo, H, batch_first=False)
    assert out2.shape == (S, B, D)
    assert jnp.allclose(out2, ref2, atol=2e-3, rtol=2e-3), "mismatch (batch_first=False)"

    print("KERNEL_OK")
</pallas_src>

<mosaic_0001>
module attributes {stable_mosaic.version = 11 : i64} {
  func.func @qkv_proj_kernel(%arg0: i32, %arg1: i32, %arg2: memref<1x8x32xf32, #tpu.memory_space<vmem>>, %arg3: memref<32x96xf32, #tpu.memory_space<vmem>>, %arg4: memref<1x4x8x8xf32, #tpu.memory_space<vmem>>, %arg5: memref<1x4x8x8xf32, #tpu.memory_space<vmem>>, %arg6: memref<1x4x8x8xf32, #tpu.memory_space<vmem>>) attributes {dimension_semantics = [#tpu.dimension_semantics<parallel>, #tpu.dimension_semantics<parallel>], iteration_bounds = array<i64: 2, 1>, scalar_prefetch = 0 : i64, scratch_operands = 0 : i64, tpu.core_type = #tpu.core_type<tc>, window_params = [{transform_indices = @transform_0, window_bounds = array<i64: 1, 8, 32>}, {pipeline_mode = #tpu.pipeline_mode<synchronous>, transform_indices = @transform_1, window_bounds = array<i64: 32, 96>}, {transform_indices = @transform_2, window_bounds = array<i64: 1, 4, 8, 8>}, {transform_indices = @transform_3, window_bounds = array<i64: 1, 4, 8, 8>}, {transform_indices = @transform_4, window_bounds = array<i64: 1, 4, 8, 8>}]} {
    %c0 = arith.constant 0 : index
    %c0_0 = arith.constant 0 : index
    %c0_1 = arith.constant 0 : index
    %0 = vector.load %arg2[%c0, %c0_0, %c0_1] : memref<1x8x32xf32, #tpu.memory_space<vmem>>, vector<1x8x32xf32>
    %1 = vector.shape_cast %0 : vector<1x8x32xf32> to vector<8x32xf32>
    %c0_2 = arith.constant 0 : index
    %c0_3 = arith.constant 0 : index
    %2 = vector.load %arg3[%c0_2, %c0_3] : memref<32x96xf32, #tpu.memory_space<vmem>>, vector<32x96xf32>
    %cst = arith.constant dense<0.000000e+00> : vector<8x96xf32>
    %3 = tpu.matmul %1, %2, %cst {dimension_numbers = #tpu.dot_dimension_numbers<[1], [0], [0], [1], [0, 0, 1, 1], [], []>} : vector<8x32xf32>, vector<32x96xf32>, vector<8x96xf32> -> vector<8x96xf32>
    %4 = vector.extract_strided_slice %3 {offsets = [0, 0], sizes = [8, 8], strides = [1, 1]} : vector<8x96xf32> to vector<8x8xf32>
    %cst_4 = arith.constant 0.353553385 : f32
    %5 = vector.broadcast %cst_4 : f32 to vector<8x8xf32>
    %6 = arith.mulf %4, %5 : vector<8x8xf32>
    %c0_5 = arith.constant 0 : index
    %c0_6 = arith.constant 0 : index
    %c0_7 = arith.constant 0 : index
    %c0_8 = arith.constant 0 : index
    %7 = vector.load %arg4[%c0_5, %c0_6, %c0_7, %c0_8] : memref<1x4x8x8xf32, #tpu.memory_space<vmem>>, vector<1x1x8x8xf32>
    %8 = vector.shape_cast %7 : vector<1x1x8x8xf32> to vector<8x8xf32>
    %9 = vector.shape_cast %6 : vector<8x8xf32> to vector<1x1x8x8xf32>
    tpu.vector_store %arg4[%c0_5, %c0_6, %c0_7, %c0_8], %9 {strides = array<i32>} : memref<1x4x8x8xf32, #tpu.memory_space<vmem>>, vector<1x1x8x8xf32>,
    %10 = vector.extract_strided_slice %3 {offsets = [0, 32], sizes = [8, 8], strides = [1, 1]} : vector<8x96xf32> to vector<8x8xf32>
    %c0_9 = arith.constant 0 : index
    %c0_10 = arith.constant 0 : index
    %c0_11 = arith.constant 0 : index
    %c0_12 = arith.constant 0 : index
    %11 = vector.load %arg5[%c0_9, %c0_10, %c0_11, %c0_12] : memref<1x4x8x8xf32, #tpu.memory_space<vmem>>, vector<1x1x8x8xf32>
    %12 = vector.shape_cast %11 : vector<1x1x8x8xf32> to vector<8x8xf32>
    %13 = vector.shape_cast %10 : vector<8x8xf32> to vector<1x1x8x8xf32>
    tpu.vector_store %arg5[%c0_9, %c0_10, %c0_11, %c0_12], %13 {strides = array<i32>} : memref<1x4x8x8xf32, #tpu.memory_space<vmem>>, vector<1x1x8x8xf32>,
    %14 = vector.extract_strided_slice %3 {offsets = [0, 64], sizes = [8, 8], strides = [1, 1]} : vector<8x96xf32> to vector<8x8xf32>
    %c0_13 = arith.constant 0 : index
    %c0_14 = arith.constant 0 : index
    %c0_15 = arith.constant 0 : index
    %c0_16 = arith.constant 0 : index
    %15 = vector.load %arg6[%c0_13, %c0_14, %c0_15, %c0_16] : memref<1x4x8x8xf32, #tpu.memory_space<vmem>>, vector<1x1x8x8xf32>
    %16 = vector.shape_cast %15 : vector<1x1x8x8xf32> to vector<8x8xf32>
    %17 = vector.shape_cast %14 : vector<8x8xf32> to vector<1x1x8x8xf32>
    tpu.vector_store %arg6[%c0_13, %c0_14, %c0_15, %c0_16], %17 {strides = array<i32>} : memref<1x4x8x8xf32, #tpu.memory_space<vmem>>, vector<1x1x8x8xf32>,
    %18 = vector.extract_strided_slice %3 {offsets = [0, 8], sizes = [8, 8], strides = [1, 1]} : vector<8x96xf32> to vector<8x8xf32>
    %cst_17 = arith.constant 0.353553385 : f32
    %19 = vector.broadcast %cst_17 : f32 to vector<8x8xf32>
    %20 = arith.mulf %18, %19 : vector<8x8xf32>
    %c0_18 = arith.constant 0 : index
    %c1 = arith.constant 1 : index
    %c0_19 = arith.constant 0 : index
    %c0_20 = arith.constant 0 : index
    %21 = vector.load %arg4[%c0_18, %c1, %c0_19, %c0_20] : memref<1x4x8x8xf32, #tpu.memory_space<vmem>>, vector<1x1x8x8xf32>
    %22 = vector.shape_cast %21 : vector<1x1x8x8xf32> to vector<8x8xf32>
    %23 = vector.shape_cast %20 : vector<8x8xf32> to vector<1x1x8x8xf32>
    tpu.vector_store %arg4[%c0_18, %c1, %c0_19, %c0_20], %23 {strides = array<i32>} : memref<1x4x8x8xf32, #tpu.memory_space<vmem>>, vector<1x1x8x8xf32>,
    %24 = vector.extract_strided_slice %3 {offsets = [0, 40], sizes = [8, 8], strides = [1, 1]} : vector<8x96xf32> to vector<8x8xf32>
    %c0_21 = arith.constant 0 : index
    %c1_22 = arith.constant 1 : index
    %c0_23 = arith.constant 0 : index
    %c0_24 = arith.constant 0 : index
    %25 = vector.load %arg5[%c0_21, %c1_22, %c0_23, %c0_24] : memref<1x4x8x8xf32, #tpu.memory_space<vmem>>, vector<1x1x8x8xf32>
    %26 = vector.shape_cast %25 : vector<1x1x8x8xf32> to vector<8x8xf32>
    %27 = vector.shape_cast %24 : vector<8x8xf32> to vector<1x1x8x8xf32>
    tpu.vector_store %arg5[%c0_21, %c1_22, %c0_23, %c0_24], %27 {strides = array<i32>} : memref<1x4x8x8xf32, #tpu.memory_space<vmem>>, vector<1x1x8x8xf32>,
    %28 = vector.extract_strided_slice %3 {offsets = [0, 72], sizes = [8, 8], strides = [1, 1]} : vector<8x96xf32> to vector<8x8xf32>
    %c0_25 = arith.constant 0 : index
    %c1_26 = arith.constant 1 : index
    %c0_27 = arith.constant 0 : index
    %c0_28 = arith.constant 0 : index
    %29 = vector.load %arg6[%c0_25, %c1_26, %c0_27, %c0_28] : memref<1x4x8x8xf32, #tpu.memory_space<vmem>>, vector<1x1x8x8xf32>
    %30 = vector.shape_cast %29 : vector<1x1x8x8xf32> to vector<8x8xf32>
    %31 = vector.shape_cast %28 : vector<8x8xf32> to vector<1x1x8x8xf32>
    tpu.vector_store %arg6[%c0_25, %c1_26, %c0_27, %c0_28], %31 {strides = array<i32>} : memref<1x4x8x8xf32, #tpu.memory_space<vmem>>, vector<1x1x8x8xf32>,
    %32 = vector.extract_strided_slice %3 {offsets = [0, 16], sizes = [8, 8], strides = [1, 1]} : vector<8x96xf32> to vector<8x8xf32>
    %cst_29 = arith.constant 0.353553385 : f32
    %33 = vector.broadcast %cst_29 : f32 to vector<8x8xf32>
    %34 = arith.mulf %32, %33 : vector<8x8xf32>
    %c0_30 = arith.constant 0 : index
    %c2 = arith.constant 2 : index
    %c0_31 = arith.constant 0 : index
    %c0_32 = arith.constant 0 : index
    %35 = vector.load %arg4[%c0_30, %c2, %c0_31, %c0_32] : memref<1x4x8x8xf32, #tpu.memory_space<vmem>>, vector<1x1x8x8xf32>
    %36 = vector.shape_cast %35 : vector<1x1x8x8xf32> to vector<8x8xf32>
    %37 = vector.shape_cast %34 : vector<8x8xf32> to vector<1x1x8x8xf32>
    tpu.vector_store %arg4[%c0_30, %c2, %c0_31, %c0_32], %37 {strides = array<i32>} : memref<1x4x8x8xf32, #tpu.memory_space<vmem>>, vector<1x1x8x8xf32>,
    %38 = vector.extract_strided_slice %3 {offsets = [0, 48], sizes = [8, 8], strides = [1, 1]} : vector<8x96xf32> to vector<8x8xf32>
    %c0_33 = arith.constant 0 : index
    %c2_34 = arith.constant 2 : index
    %c0_35 = arith.constant 0 : index
    %c0_36 = arith.constant 0 : index
    %39 = vector.load %arg5[%c0_33, %c2_34, %c0_35, %c0_36] : memref<1x4x8x8xf32, #tpu.memory_space<vmem>>, vector<1x1x8x8xf32>
    %40 = vector.shape_cast %39 : vector<1x1x8x8xf32> to vector<8x8xf32>
    %41 = vector.shape_cast %38 : vector<8x8xf32> to vector<1x1x8x8xf32>
    tpu.vector_store %arg5[%c0_33, %c2_34, %c0_35, %c0_36], %41 {strides = array<i32>} : memref<1x4x8x8xf32, #tpu.memory_space<vmem>>, vector<1x1x8x8xf32>,
    %42 = vector.extract_strided_slice %3 {offsets = [0, 80], sizes = [8, 8], strides = [1, 1]} : vector<8x96xf32> to vector<8x8xf32>
    %c0_37 = arith.constant 0 : index
    %c2_38 = arith.constant 2 : index
    %c0_39 = arith.constant 0 : index
    %c0_40 = arith.constant 0 : index
    %43 = vector.load %arg6[%c0_37, %c2_38, %c0_39, %c0_40] : memref<1x4x8x8xf32, #tpu.memory_space<vmem>>, vector<1x1x8x8xf32>
    %44 = vector.shape_cast %43 : vector<1x1x8x8xf32> to vector<8x8xf32>
    %45 = vector.shape_cast %42 : vector<8x8xf32> to vector<1x1x8x8xf32>
    tpu.vector_store %arg6[%c0_37, %c2_38, %c0_39, %c0_40], %45 {strides = array<i32>} : memref<1x4x8x8xf32, #tpu.memory_space<vmem>>, vector<1x1x8x8xf32>,
    %46 = vector.extract_strided_slice %3 {offsets = [0, 24], sizes = [8, 8], strides = [1, 1]} : vector<8x96xf32> to vector<8x8xf32>
    %cst_41 = arith.constant 0.353553385 : f32
    %47 = vector.broadcast %cst_41 : f32 to vector<8x8xf32>
    %48 = arith.mulf %46, %47 : vector<8x8xf32>
    %c0_42 = arith.constant 0 : index
    %c3 = arith.constant 3 : index
    %c0_43 = arith.constant 0 : index
    %c0_44 = arith.constant 0 : index
    %49 = vector.load %arg4[%c0_42, %c3, %c0_43, %c0_44] : memref<1x4x8x8xf32, #tpu.memory_space<vmem>>, vector<1x1x8x8xf32>
    %50 = vector.shape_cast %49 : vector<1x1x8x8xf32> to vector<8x8xf32>
    %51 = vector.shape_cast %48 : vector<8x8xf32> to vector<1x1x8x8xf32>
    tpu.vector_store %arg4[%c0_42, %c3, %c0_43, %c0_44], %51 {strides = array<i32>} : memref<1x4x8x8xf32, #tpu.memory_space<vmem>>, vector<1x1x8x8xf32>,
    %52 = vector.extract_strided_slice %3 {offsets = [0, 56], sizes = [8, 8], strides = [1, 1]} : vector<8x96xf32> to vector<8x8xf32>
    %c0_45 = arith.constant 0 : index
    %c3_46 = arith.constant 3 : index
    %c0_47 = arith.constant 0 : index
    %c0_48 = arith.constant 0 : index
    %53 = vector.load %arg5[%c0_45, %c3_46, %c0_47, %c0_48] : memref<1x4x8x8xf32, #tpu.memory_space<vmem>>, vector<1x1x8x8xf32>
    %54 = vector.shape_cast %53 : vector<1x1x8x8xf32> to vector<8x8xf32>
    %55 = vector.shape_cast %52 : vector<8x8xf32> to vector<1x1x8x8xf32>
    tpu.vector_store %arg5[%c0_45, %c3_46, %c0_47, %c0_48], %55 {strides = array<i32>} : memref<1x4x8x8xf32, #tpu.memory_space<vmem>>, vector<1x1x8x8xf32>,
    %56 = vector.extract_strided_slice %3 {offsets = [0, 88], sizes = [8, 8], strides = [1, 1]} : vector<8x96xf32> to vector<8x8xf32>
    %c0_49 = arith.constant 0 : index
    %c3_50 = arith.constant 3 : index
    %c0_51 = arith.constant 0 : index
    %c0_52 = arith.constant 0 : index
    %57 = vector.load %arg6[%c0_49, %c3_50, %c0_51, %c0_52] : memref<1x4x8x8xf32, #tpu.memory_space<vmem>>, vector<1x1x8x8xf32>
    %58 = vector.shape_cast %57 : vector<1x1x8x8xf32> to vector<8x8xf32>
    %59 = vector.shape_cast %56 : vector<8x8xf32> to vector<1x1x8x8xf32>
    tpu.vector_store %arg6[%c0_49, %c3_50, %c0_51, %c0_52], %59 {strides = array<i32>} : memref<1x4x8x8xf32, #tpu.memory_space<vmem>>, vector<1x1x8x8xf32>,
    return
  }
  func.func @transform_0(%arg0: i32, %arg1: i32) -> (i32, i32, i32) {
    %c0_i32 = arith.constant 0 : i32
    %c0_i32_0 = arith.constant 0 : i32
    return %arg0, %arg1, %c0_i32 : i32, i32, i32
  }
  func.func @transform_1(%arg0: i32, %arg1: i32) -> (i32, i32) {
    %c0_i32 = arith.constant 0 : i32
    %c0_i32_0 = arith.constant 0 : i32
    %c0_i32_1 = arith.constant 0 : i32
    return %c0_i32, %c0_i32_0 : i32, i32
  }
  func.func @transform_2(%arg0: i32, %arg1: i32) -> (i32, i32, i32, i32) {
    %c0_i32 = arith.constant 0 : i32
    %c0_i32_0 = arith.constant 0 : i32
    %c0_i32_1 = arith.constant 0 : i32
    return %arg0, %c0_i32, %arg1, %c0_i32_0 : i32, i32, i32, i32
  }
  func.func @transform_3(%arg0: i32, %arg1: i32) -> (i32, i32, i32, i32) {
    %c0_i32 = arith.constant 0 : i32
    %c0_i32_0 = arith.constant 0 : i32
    %c0_i32_1 = arith.constant 0 : i32
    return %arg0, %c0_i32, %arg1, %c0_i32_0 : i32, i32, i32, i32
  }
  func.func @transform_4(%arg0: i32, %arg1: i32) -> (i32, i32, i32, i32) {
    %c0_i32 = arith.constant 0 : i32
    %c0_i32_0 = arith.constant 0 : i32
    %c0_i32_1 = arith.constant 0 : i32
    return %arg0, %c0_i32, %arg1, %c0_i32_0 : i32, i32, i32, i32
  }
}

module attributes {stable_mosaic.version = 11 : i64} {
  func.func @qkv_proj_kernel(%arg0: i32, %arg1: i32, %arg2: memref<1x8x32xf32, #tpu.memory_space<vmem>>, %arg3: memref<32x96xf32, #tpu.memory_space<vmem>>, %arg4: memref<1x4x8x8xf32, #tpu.memory_space<vmem>>, %arg5: memref<1x4x8x8xf32, #tpu.memory_space<vmem>>, %arg6: memref<1x4x8x8xf32, #tpu.memory_space<vmem>>) attributes {dimension_semantics = [#tpu.dimension_semantics<parallel>, #tpu.dimension_semantics<parallel>], iteration_bounds = array<i64: 2, 1>, scalar_prefetch = 0 : i64, scratch_operands = 0 : i64, tpu.core_type = #tpu.core_type<tc>, window_params = [{transform_indices = @transform_0, window_bounds = array<i64: 1, 8, 32>}, {pipeline_mode = #tpu.pipeline_mode<synchronous>, transform_indices = @transform_1, window_bounds = array<i64: 32, 96>}, {transform_indices = @transform_2, window_bounds = array<i64: 1, 4, 8, 8>}, {transform_indices = @transform_3, window_bounds = array<i64: 1, 4, 8, 8>}, {transform_indices = @transform_4, window_bounds = array<i64: 1, 4, 8, 8>}]} {
    %c0 = arith.constant 0 : index
    %c0_0 = arith.constant 0 : index
    %c0_1 = arith.constant 0 : index
    %0 = vector.load %arg2[%c0, %c0_0, %c0_1] : memref<1x8x32xf32, #tpu.memory_space<vmem>>, vector<1x8x32xf32>
    %1 = vector.shape_cast %0 : vector<1x8x32xf32> to vector<8x32xf32>
    %c0_2 = arith.constant 0 : index
    %c0_3 = arith.constant 0 : index
    %2 = vector.load %arg3[%c0_2, %c0_3] : memref<32x96xf32, #tpu.memory_space<vmem>>, vector<32x96xf32>
    %cst = arith.constant dense<0.000000e+00> : vector<8x96xf32>
    %3 = tpu.matmul %1, %2, %cst {dimension_numbers = #tpu.dot_dimension_numbers<[1], [0], [0], [1], [0, 0, 1, 1], [], []>} : vector<8x32xf32>, vector<32x96xf32>, vector<8x96xf32> -> vector<8x96xf32>
    %4 = vector.extract_strided_slice %3 {offsets = [0, 0], sizes = [8, 8], strides = [1, 1]} : vector<8x96xf32> to vector<8x8xf32>
    %cst_4 = arith.constant 0.353553385 : f32
    %5 = vector.broadcast %cst_4 : f32 to vector<8x8xf32>
    %6 = arith.mulf %4, %5 : vector<8x8xf32>
    %c0_5 = arith.constant 0 : index
    %c0_6 = arith.constant 0 : index
    %c0_7 = arith.constant 0 : index
    %c0_8 = arith.constant 0 : index
    %7 = vector.load %arg4[%c0_5, %c0_6, %c0_7, %c0_8] : memref<1x4x8x8xf32, #tpu.memory_space<vmem>>, vector<1x1x8x8xf32>
    %8 = vector.shape_cast %7 : vector<1x1x8x8xf32> to vector<8x8xf32>
    %9 = vector.shape_cast %6 : vector<8x8xf32> to vector<1x1x8x8xf32>
    tpu.vector_store %arg4[%c0_5, %c0_6, %c0_7, %c0_8], %9 {strides = array<i32>} : memref<1x4x8x8xf32, #tpu.memory_space<vmem>>, vector<1x1x8x8xf32>,
    %10 = vector.extract_strided_slice %3 {offsets = [0, 32], sizes = [8, 8], strides = [1, 1]} : vector<8x96xf32> to vector<8x8xf32>
    %c0_9 = arith.constant 0 : index
    %c0_10 = arith.constant 0 : index
    %c0_11 = arith.constant 0 : index
    %c0_12 = arith.constant 0 : index
    %11 = vector.load %arg5[%c0_9, %c0_10, %c0_11, %c0_12] : memref<1x4x8x8xf32, #tpu.memory_space<vmem>>, vector<1x1x8x8xf32>
    %12 = vector.shape_cast %11 : vector<1x1x8x8xf32> to vector<8x8xf32>
    %13 = vector.shape_cast %10 : vector<8x8xf32> to vector<1x1x8x8xf32>
    tpu.vector_store %arg5[%c0_9, %c0_10, %c0_11, %c0_12], %13 {strides = array<i32>} : memref<1x4x8x8xf32, #tpu.memory_space<vmem>>, vector<1x1x8x8xf32>,
    %14 = vector.extract_strided_slice %3 {offsets = [0, 64], sizes = [8, 8], strides = [1, 1]} : vector<8x96xf32> to vector<8x8xf32>
    %c0_13 = arith.constant 0 : index
    %c0_14 = arith.constant 0 : index
    %c0_15 = arith.constant 0 : index
    %c0_16 = arith.constant 0 : index
    %15 = vector.load %arg6[%c0_13, %c0_14, %c0_15, %c0_16] : memref<1x4x8x8xf32, #tpu.memory_space<vmem>>, vector<1x1x8x8xf32>
    %16 = vector.shape_cast %15 : vector<1x1x8x8xf32> to vector<8x8xf32>
    %17 = vector.shape_cast %14 : vector<8x8xf32> to vector<1x1x8x8xf32>
    tpu.vector_store %arg6[%c0_13, %c0_14, %c0_15, %c0_16], %17 {strides = array<i32>} : memref<1x4x8x8xf32, #tpu.memory_space<vmem>>, vector<1x1x8x8xf32>,
    %18 = vector.extract_strided_slice %3 {offsets = [0, 8], sizes = [8, 8], strides = [1, 1]} : vector<8x96xf32> to vector<8x8xf32>
    %cst_17 = arith.constant 0.353553385 : f32
    %19 = vector.broadcast %cst_17 : f32 to vector<8x8xf32>
    %20 = arith.mulf %18, %19 : vector<8x8xf32>
    %c0_18 = arith.constant 0 : index
    %c1 = arith.constant 1 : index
    %c0_19 = arith.constant 0 : index
    %c0_20 = arith.constant 0 : index
    %21 = vector.load %arg4[%c0_18, %c1, %c0_19, %c0_20] : memref<1x4x8x8xf32, #tpu.memory_space<vmem>>, vector<1x1x8x8xf32>
    %22 = vector.shape_cast %21 : vector<1x1x8x8xf32> to vector<8x8xf32>
    %23 = vector.shape_cast %20 : vector<8x8xf32> to vector<1x1x8x8xf32>
    tpu.vector_store %arg4[%c0_18, %c1, %c0_19, %c0_20], %23 {strides = array<i32>} : memref<1x4x8x8xf32, #tpu.memory_space<vmem>>, vector<1x1x8x8xf32>,
    %24 = vector.extract_strided_slice %3 {offsets = [0, 40], sizes = [8, 8], strides = [1, 1]} : vector<8x96xf32> to vector<8x8xf32>
    %c0_21 = arith.constant 0 : index
    %c1_22 = arith.constant 1 : index
    %c0_23 = arith.constant 0 : index
    %c0_24 = arith.constant 0 : index
    %25 = vector.load %arg5[%c0_21, %c1_22, %c0_23, %c0_24] : memref<1x4x8x8xf32, #tpu.memory_space<vmem>>, vector<1x1x8x8xf32>
    %26 = vector.shape_cast %25 : vector<1x1x8x8xf32> to vector<8x8xf32>
    %27 = vector.shape_cast %24 : vector<8x8xf32> to vector<1x1x8x8xf32>
    tpu.vector_store %arg5[%c0_21, %c1_22, %c0_23, %c0_24], %27 {strides = array<i32>} : memref<1x4x8x8xf32, #tpu.memory_space<vmem>>, vector<1x1x8x8xf32>,
    %28 = vector.extract_strided_slice %3 {offsets = [0, 72], sizes = [8, 8], strides = [1, 1]} : vector<8x96xf32> to vector<8x8xf32>
    %c0_25 = arith.constant 0 : index
    %c1_26 = arith.constant 1 : index
    %c0_27 = arith.constant 0 : index
    %c0_28 = arith.constant 0 : index
    %29 = vector.load %arg6[%c0_25, %c1_26, %c0_27, %c0_28] : memref<1x4x8x8xf32, #tpu.memory_space<vmem>>, vector<1x1x8x8xf32>
    %30 = vector.shape_cast %29 : vector<1x1x8x8xf32> to vector<8x8xf32>
    %31 = vector.shape_cast %28 : vector<8x8xf32> to vector<1x1x8x8xf32>
    tpu.vector_store %arg6[%c0_25, %c1_26, %c0_27, %c0_28], %31 {strides = array<i32>} : memref<1x4x8x8xf32, #tpu.memory_space<vmem>>, vector<1x1x8x8xf32>,
    %32 = vector.extract_strided_slice %3 {offsets = [0, 16], sizes = [8, 8], strides = [1, 1]} : vector<8x96xf32> to vector<8x8xf32>
    %cst_29 = arith.constant 0.353553385 : f32
    %33 = vector.broadcast %cst_29 : f32 to vector<8x8xf32>
    %34 = arith.mulf %32, %33 : vector<8x8xf32>
    %c0_30 = arith.constant 0 : index
    %c2 = arith.constant 2 : index
    %c0_31 = arith.constant 0 : index
    %c0_32 = arith.constant 0 : index
    %35 = vector.load %arg4[%c0_30, %c2, %c0_31, %c0_32] : memref<1x4x8x8xf32, #tpu.memory_space<vmem>>, vector<1x1x8x8xf32>
    %36 = vector.shape_cast %35 : vector<1x1x8x8xf32> to vector<8x8xf32>
    %37 = vector.shape_cast %34 : vector<8x8xf32> to vector<1x1x8x8xf32>
    tpu.vector_store %arg4[%c0_30, %c2, %c0_31, %c0_32], %37 {strides = array<i32>} : memref<1x4x8x8xf32, #tpu.memory_space<vmem>>, vector<1x1x8x8xf32>,
    %38 = vector.extract_strided_slice %3 {offsets = [0, 48], sizes = [8, 8], strides = [1, 1]} : vector<8x96xf32> to vector<8x8xf32>
    %c0_33 = arith.constant 0 : index
    %c2_34 = arith.constant 2 : index
    %c0_35 = arith.constant 0 : index
    %c0_36 = arith.constant 0 : index
    %39 = vector.load %arg5[%c0_33, %c2_34, %c0_35, %c0_36] : memref<1x4x8x8xf32, #tpu.memory_space<vmem>>, vector<1x1x8x8xf32>
    %40 = vector.shape_cast %39 : vector<1x1x8x8xf32> to vector<8x8xf32>
    %41 = vector.shape_cast %38 : vector<8x8xf32> to vector<1x1x8x8xf32>
    tpu.vector_store %arg5[%c0_33, %c2_34, %c0_35, %c0_36], %41 {strides = array<i32>} : memref<1x4x8x8xf32, #tpu.memory_space<vmem>>, vector<1x1x8x8xf32>,
    %42 = vector.extract_strided_slice %3 {offsets = [0, 80], sizes = [8, 8], strides = [1, 1]} : vector<8x96xf32> to vector<8x8xf32>
    %c0_37 = arith.constant 0 : index
    %c2_38 = arith.constant 2 : index
    %c0_39 = arith.constant 0 : index
    %c0_40 = arith.constant 0 : index
    %43 = vector.load %arg6[%c0_37, %c2_38, %c0_39, %c0_40] : memref<1x4x8x8xf32, #tpu.memory_space<vmem>>, vector<1x1x8x8xf32>
    %44 = vector.shape_cast %43 : vector<1x1x8x8xf32> to vector<8x8xf32>
    %45 = vector.shape_cast %42 : vector<8x8xf32> to vector<1x1x8x8xf32>
    tpu.vector_store %arg6[%c0_37, %c2_38, %c0_39, %c0_40], %45 {strides = array<i32>} : memref<1x4x8x8xf32, #tpu.memory_space<vmem>>, vector<1x1x8x8xf32>,
    %46 = vector.extract_strided_slice %3 {offsets = [0, 24], sizes = [8, 8], strides = [1, 1]} : vector<8x96xf32> to vector<8x8xf32>
    %cst_41 = arith.constant 0.353553385 : f32
    %47 = vector.broadcast %cst_41 : f32 to vector<8x8xf32>
    %48 = arith.mulf %46, %47 : vector<8x8xf32>
    %c0_42 = arith.constant 0 : index
    %c3 = arith.constant 3 : index
    %c0_43 = arith.constant 0 : index
    %c0_44 = arith.constant 0 : index
    %49 = vector.load %arg4[%c0_42, %c3, %c0_43, %c0_44] : memref<1x4x8x8xf32, #tpu.memory_space<vmem>>, vector<1x1x8x8xf32>
    %50 = vector.shape_cast %49 : vector<1x1x8x8xf32> to vector<8x8xf32>
    %51 = vector.shape_cast %48 : vector<8x8xf32> to vector<1x1x8x8xf32>
    tpu.vector_store %arg4[%c0_42, %c3, %c0_43, %c0_44], %51 {strides = array<i32>} : memref<1x4x8x8xf32, #tpu.memory_space<vmem>>, vector<1x1x8x8xf32>,
    %52 = vector.extract_strided_slice %3 {offsets = [0, 56], sizes = [8, 8], strides = [1, 1]} : vector<8x96xf32> to vector<8x8xf32>
    %c0_45 = arith.constant 0 : index
    %c3_46 = arith.constant 3 : index
    %c0_47 = arith.constant 0 : index
    %c0_48 = arith.constant 0 : index
    %53 = vector.load %arg5[%c0_45, %c3_46, %c0_47, %c0_48] : memref<1x4x8x8xf32, #tpu.memory_space<vmem>>, vector<1x1x8x8xf32>
    %54 = vector.shape_cast %53 : vector<1x1x8x8xf32> to vector<8x8xf32>
    %55 = vector.shape_cast %52 : vector<8x8xf32> to vector<1x1x8x8xf32>
    tpu.vector_store %arg5[%c0_45, %c3_46, %c0_47, %c0_48], %55 {strides = array<i32>} : memref<1x4x8x8xf32, #tpu.memory_space<vmem>>, vector<1x1x8x8xf32>,
    %56 = vector.extract_strided_slice %3 {offsets = [0, 88], sizes = [8, 8], strides = [1, 1]} : vector<8x96xf32> to vector<8x8xf32>
    %c0_49 = arith.constant 0 : index
    %c3_50 = arith.constant 3 : index
    %c0_51 = arith.constant 0 : index
    %c0_52 = arith.constant 0 : index
    %57 = vector.load %arg6[%c0_49, %c3_50, %c0_51, %c0_52] : memref<1x4x8x8xf32, #tpu.memory_space<vmem>>, vector<1x1x8x8xf32>
    %58 = vector.shape_cast %57 : vector<1x1x8x8xf32> to vector<8x8xf32>
    %59 = vector.shape_cast %56 : vector<8x8xf32> to vector<1x1x8x8xf32>
    tpu.vector_store %arg6[%c0_49, %c3_50, %c0_51, %c0_52], %59 {strides = array<i32>} : memref<1x4x8x8xf32, #tpu.memory_space<vmem>>, vector<1x1x8x8xf32>,
    return
  }
  func.func @transform_0(%arg0: i32, %arg1: i32) -> (i32, i32, i32) {
    %c0_i32 = arith.constant 0 : i32
    %c0_i32_0 = arith.constant 0 : i32
    return %arg0, %arg1, %c0_i32 : i32, i32, i32
  }
  func.func @transform_1(%arg0: i32, %arg1: i32) -> (i32, i32) {
    %c0_i32 = arith.constant 0 : i32
    %c0_i32_0 = arith.constant 0 : i32
    %c0_i32_1 = arith.constant 0 : i32
    return %c0_i32, %c0_i32_0 : i32, i32
  }
  func.func @transform_2(%arg0: i32, %arg1: i32) -> (i32, i32, i32, i32) {
    %c0_i32 = arith.constant 0 : i32
    %c0_i32_0 = arith.constant 0 : i32
    %c0_i32_1 = arith.constant 0 : i32
    return %arg0, %c0_i32, %arg1, %c0_i32_0 : i32, i32, i32, i32
  }
  func.func @transform_3(%arg0: i32, %arg1: i32) -> (i32, i32, i32, i32) {
    %c0_i32 = arith.constant 0 : i32
    %c0_i32_0 = arith.constant 0 : i32
    %c0_i32_1 = arith.constant 0 : i32
    return %arg0, %c0_i32, %arg1, %c0_i32_0 : i32, i32, i32, i32
  }
  func.func @transform_4(%arg0: i32, %arg1: i32) -> (i32, i32, i32, i32) {
    %c0_i32 = arith.constant 0 : i32
    %c0_i32_0 = arith.constant 0 : i32
    %c0_i32_1 = arith.constant 0 : i32
    return %arg0, %c0_i32, %arg1, %c0_i32_0 : i32, i32, i32, i32
  }
}

</mosaic_0001>

<llo_original>
// kernel: tpu_custom_call.1
$region0: #{tpu_custom_call.1}
  #allocation0 [shape = 'u32[]', space=smem, size = 0x4, offset = 0x4, fixed_abs, tag = 'smem constant byte address 0x4 - core index']
  #allocation1 [shape = 'u32[72,128]{1,0:T(1,128)}', space=vmem, size = 0x9000, scoped, tag = 'internal scratch']
  %s0 = inlined_call_operand.hbm [shape: f32[2,8,32], index: 0, kind: input, shape index: {}]
  %s1 = inlined_call_operand.hbm [shape: f32[32,96], index: 1, kind: input, shape index: {}]
  %s2 = inlined_call_operand.hbm [shape: f32[2,4,8,8], index: 2, kind: output, shape index: {0}]
  %s3 = inlined_call_operand.hbm [shape: f32[2,4,8,8], index: 3, kind: output, shape index: {1}]
  %s4 = inlined_call_operand.hbm [shape: f32[2,4,8,8], index: 4, kind: output, shape index: {2}]
  %5 = xla_tuple %s2, %s3, %s4
  %s6 = sld [smem:[#allocation0]]
  $region65: #{tpu_custom_call.1} parent=0
    _
  %s8 = ssub.s32 1, %s6
  %s9 = scalar_select 0, %s8, %s6
  $region1: #{tpu_custom_call.1} parent=0
    #allocation2 [shape = 'u8[8192]{0}', space=vmem, size = 0x2000, scoped, tag = 'input window, operand 0']
    #allocation3 [shape = 's32[2]{0}', space=sflag, size = 0x8, scoped, tag = 'scoped memory for tpu_custom_call.1']
    #allocation4 [shape = 's32[2]{0}', space=sflag, size = 0x8, scoped, tag = 'scoped memory for tpu_custom_call.1']
    #allocation5 [shape = 'u8[16384]{0}', space=vmem, size = 0x4000, scoped, tag = 'input window, operand 1, single buffered']
    #allocation6 [shape = 's32[1]{0}', space=sflag, size = 0x4, scoped, tag = 'scoped memory for tpu_custom_call.1']
    #allocation7 [shape = 'u8[32768]{0}', space=vmem, size = 0x8000, scoped, tag = 'output window, operand 0']
    #allocation8 [shape = 'u8[32768]{0}', space=vmem, size = 0x8000, scoped, tag = 'output window, operand 1']
    #allocation9 [shape = 's32[2]{0}', space=sflag, size = 0x8, scoped, tag = 'scoped memory for tpu_custom_call.1']
    #allocation10 [shape = 'u8[32768]{0}', space=vmem, size = 0x8000, scoped, tag = 'output window, operand 2']
    %10 = vsyncpa [#allocation3], 0
    %s11 = scalar_lea.sflag [#allocation3], 1
    %12 = vsyncpa %s11, 0
    %13 = vsyncpa [#allocation6], 0
    %14 = vsyncpa [#allocation4], 0
    %s15 = scalar_lea.sflag [#allocation4], 1
    %16 = vsyncpa %s15, 0
    %17 = vsyncpa [#allocation9], 0
    %s18 = scalar_lea.sflag [#allocation9], 1
    %19 = vsyncpa %s18, 0
    loop: start=0, step=1, limit=4
    $region2: #{tpu_custom_call.1} parent=1 // loop_pre_header
      _
    $region3: #{tpu_custom_call.1} parent=1 // loop_header
      %s21 = sphi 0, %s25
      %p22 = scmp.ge.s32.totalorder %s21, 4
      %s28 = sphi 0, %s40
      %s29 = sphi 0, %s36
      %s30 = sphi 0, %s28
      %s31 = sphi 0, %s29
      %s32 = sphi 0, %s30
      %s33 = sphi 0, %s31
      %s45 = sphi 0, %s47
      %s48 = sphi 0, %s45
      %s49 = sphi 0, %s48
      %s65 = sphi 0, %s49
      %s69 = sphi 0, %s69
      %s71 = sphi 0, %s69
      %s72 = sphi 0, %s71
      %s86 = sphi 0, %s72
      %s94 = sphi 0, %s96
      %s97 = sphi 0, %s94
      %s98 = sphi 0, %s97
      %s114 = sphi 0, %s98
      %s122 = sphi 0, %s124
      %s125 = sphi 0, %s122
      %s126 = sphi 0, %s125
      %s142 = sphi 0, %s126
      %s150 = sphi 0, %s152
      %s153 = sphi 0, %s150
      %s154 = sphi 0, %s153
      %s170 = sphi 0, %s154
    $region4: #{tpu_custom_call.1} parent=1 // loop_header_branch
      %24 = sbr.rel (%p22) target = $region8
    $region5: #{tpu_custom_call.1} parent=1 // loop_body
      %s26 = ssub.s32 %s21, 1
      %s27 = ssub.s32 %s21, 2
      %s34 = sadd.s32 1, %s29
      %p35 = scmp.ge.s32.totalorder %s34, 1
      %s36 = scalar_select %p35, 0, %s34
      %s37 = sadd.s32 1, %s28
      %s38 = scalar_select %p35, %s37, %s28
      %p39 = scmp.ge.s32.totalorder %s38, 2
      %s40 = scalar_select %p39, 0, %s38
      %s41 = ssub.s32 %s28, %s40
      %s42 = ssub.s32 %s29, %s36
      %s43 = sor.u32 %s41, %s42
      %p44 = scmp.eq.s32.totalorder %s43, 0
      %s46 = sadd.s32 %s45, 1
      %s47 = scalar_select %p44, %s45, %s46
      %p50 = pneg %p44
      %p51 = scmp.eq.s32.totalorder %s21, 1
      %p52 = por %p50, %p51
      %p53 = scmp.ne.s32.totalorder %s45, %s48
      %p54 = scmp.eq.s32.totalorder %s21, 0
      %p55 = por %p53, %p54
      %p56 = scmp.ne.s32.totalorder %s45, %s48
      %p57 = scmp.eq.s32.totalorder %s26, 1
      %p58 = por %p56, %p57
      %p59 = scmp.ne.s32.totalorder %s48, %s49
      %p60 = scmp.eq.s32.totalorder %s26, 0
      %p61 = por %p59, %p60
      %p62 = scmp.ne.s32.totalorder %s48, %s49
      %p63 = scmp.eq.s32.totalorder %s27, 1
      %p64 = por %p62, %p63
      %p66 = scmp.ne.s32.totalorder %s49, %s65
      %p67 = scmp.eq.s32.totalorder %s27, 0
      %p68 = por %p66, %p67
      %s70 = sadd.s32 %s69, 1
      %p73 = scmp.eq.s32.totalorder %s21, 1
      %p74 = scmp.ne.s32.totalorder %s69, %s71
      %p75 = scmp.eq.s32.totalorder %s21, 0
      %p76 = por %p74, %p75
      %p77 = scmp.ne.s32.totalorder %s69, %s71
      %p78 = scmp.eq.s32.totalorder %s26, 1
      %p79 = por %p77, %p78
      %p80 = scmp.ne.s32.totalorder %s71, %s72
      %p81 = scmp.eq.s32.totalorder %s26, 0
      %p82 = por %p80, %p81
      %p83 = scmp.ne.s32.totalorder %s71, %s72
      %p84 = scmp.eq.s32.totalorder %s27, 1
      %p85 = por %p83, %p84
      %p87 = scmp.ne.s32.totalorder %s72, %s86
      %p88 = scmp.eq.s32.totalorder %s27, 0
      %p89 = por %p87, %p88
      %s90 = ssub.s32 %s28, %s40
      %s91 = ssub.s32 %s29, %s36
      %s92 = sor.u32 %s90, %s91
      %p93 = scmp.eq.s32.totalorder %s92, 0
      %s95 = sadd.s32 %s94, 1
      %s96 = scalar_select %p93, %s94, %s95
      %p99 = pneg %p93
      %p100 = scmp.eq.s32.totalorder %s21, 1
      %p101 = por %p99, %p100
      %p102 = scmp.ne.s32.totalorder %s94, %s97
      %p103 = scmp.eq.s32.totalorder %s21, 0
      %p104 = por %p102, %p103
      %p105 = scmp.ne.s32.totalorder %s94, %s97
      %p106 = scmp.eq.s32.totalorder %s26, 1
      %p107 = por %p105, %p106
      %p108 = scmp.ne.s32.totalorder %s97, %s98
      %p109 = scmp.eq.s32.totalorder %s26, 0
      %p110 = por %p108, %p109
      %p111 = scmp.ne.s32.totalorder %s97, %s98
      %p112 = scmp.eq.s32.totalorder %s27, 1
      %p113 = por %p111, %p112
      %p115 = scmp.ne.s32.totalorder %s98, %s114
      %p116 = scmp.eq.s32.totalorder %s27, 0
      %p117 = por %p115, %p116
      %s118 = ssub.s32 %s28, %s40
      %s119 = ssub.s32 %s29, %s36
      %s120 = sor.u32 %s118, %s119
      %p121 = scmp.eq.s32.totalorder %s120, 0
      %s123 = sadd.s32 %s122, 1
      %s124 = scalar_select %p121, %s122, %s123
      %p127 = pneg %p121
      %p128 = scmp.eq.s32.totalorder %s21, 1
      %p129 = por %p127, %p128
      %p130 = scmp.ne.s32.totalorder %s122, %s125
      %p131 = scmp.eq.s32.totalorder %s21, 0
      %p132 = por %p130, %p131
      %p133 = scmp.ne.s32.totalorder %s122, %s125
      %p134 = scmp.eq.s32.totalorder %s26, 1
      %p135 = por %p133, %p134
      %p136 = scmp.ne.s32.totalorder %s125, %s126
      %p137 = scmp.eq.s32.totalorder %s26, 0
      %p138 = por %p136, %p137
      %p139 = scmp.ne.s32.totalorder %s125, %s126
      %p140 = scmp.eq.s32.totalorder %s27, 1
      %p141 = por %p139, %p140
      %p143 = scmp.ne.s32.totalorder %s126, %s142
      %p144 = scmp.eq.s32.totalorder %s27, 0
      %p145 = por %p143, %p144
      %s146 = ssub.s32 %s28, %s40
      %s147 = ssub.s32 %s29, %s36
      %s148 = sor.u32 %s146, %s147
      %p149 = scmp.eq.s32.totalorder %s148, 0
      %s151 = sadd.s32 %s150, 1
      %s152 = scalar_select %p149, %s150, %s151
      %p155 = pneg %p149
      %p156 = scmp.eq.s32.totalorder %s21, 1
      %p157 = por %p155, %p156
      %p158 = scmp.ne.s32.totalorder %s150, %s153
      %p159 = scmp.eq.s32.totalorder %s21, 0
      %p160 = por %p158, %p159
      %p161 = scmp.ne.s32.totalorder %s150, %s153
      %p162 = scmp.eq.s32.totalorder %s26, 1
      %p163 = por %p161, %p162
      %p164 = scmp.ne.s32.totalorder %s153, %s154
      %p165 = scmp.eq.s32.totalorder %s26, 0
      %p166 = por %p164, %p165
      %p167 = scmp.ne.s32.totalorder %s153, %s154
      %p168 = scmp.eq.s32.totalorder %s27, 1
      %p169 = por %p167, %p168
      %p171 = scmp.ne.s32.totalorder %s154, %s170
      %p172 = scmp.eq.s32.totalorder %s27, 0
      %p173 = por %p171, %p172
      %p174 = scmp.le.s32.totalorder 1, %s21
      %p175 = scmp.lt.s32.totalorder %s21, 3
      %p176 = pnand %p174, %p175
      %p177 = pneg %p176
      // Predicated region
      $region9: #{tpu_custom_call.1} parent=5 // pred_check
        _
      $region10: #{tpu_custom_call.1} parent=5 // pred_check_branch
        %179 = sbr.rel (%p176) target = $region12
      $region11: #{tpu_custom_call.1} parent=5 // pred_region
        %s180 = ssub.s32 %s21, 1
        // Predicated region
        $region13: #{tpu_custom_call.1} parent=11 // pred_check
          %p181 = pneg %p82
        $region14: #{tpu_custom_call.1} parent=11 // pred_check_branch
          %183 = sbr.rel (%p181) target = $region16
        $region15: #{tpu_custom_call.1} parent=11 // pred_region
          %185 = vsyncadd [#allocation6], 0
          %s186 = sshll.u32 %s1, 4
          %s187 = int_to_ptr.hbm [resolvable:$true] %s186
          %s188 = sshll.u32 [#allocation5], 4
          %s189 = int_to_ptr.vmem [resolvable:$true] %s188
          %194 = dma.hbm_to_vmem [thread:$0]  %s187, 512, %s189, [#allocation6], 128, 128, 8
        $region16: #{tpu_custom_call.1} parent=11 // pred_fallthru
          _
      $region12: #{tpu_custom_call.1} parent=5 // pred_fallthru
        _
      %p195 = scmp.lt.s32.totalorder %s21, 2
      // Predicated region
      $region17: #{tpu_custom_call.1} parent=5 // pred_check
        %p196 = pneg %p195
      $region18: #{tpu_custom_call.1} parent=5 // pred_check_branch
        %198 = sbr.rel (%p196) target = $region20
      $region19: #{tpu_custom_call.1} parent=5 // pred_region
        // Predicated region
        $region21: #{tpu_custom_call.1} parent=19 // pred_check
          %p199 = pneg %p55
        $region22: #{tpu_custom_call.1} parent=19 // pred_check_branch
          %201 = sbr.rel (%p199) target = $region24
        $region23: #{tpu_custom_call.1} parent=19 // pred_region
          %s202 = sand.u32 %s45, 1
          %s203 = scalar_lea.sflag [#allocation3], %s202
          %s204 = sand.u32 %s45, 1
          %s205 = smul.addr %s204, 8
          %s206 = scalar_lea.vmem [#allocation2], %s205
          %208 = vsyncadd %s203, 0
          %s209 = sadd.s32 %s29, %s28
          %s210 = smul.addr %s209, 8
          %s211 = scalar_lea.hbm %s0, %s210
          %s213 = sshll.u32 %s211, 4
          %s214 = int_to_ptr.hbm [resolvable:$true] %s213
          %s215 = sshll.u32 %s206, 4
          %s216 = int_to_ptr.vmem [resolvable:$true] %s215
          %218 = dma.hbm_to_vmem [thread:$0]  %s214, 128, %s216, %s203
        $region24: #{tpu_custom_call.1} parent=19 // pred_fallthru
          _
      $region20: #{tpu_custom_call.1} parent=5 // pred_fallthru
        _
      %p219 = scmp.le.s32.totalorder 1, %s21
      %p220 = scmp.lt.s32.totalorder %s21, 3
      %p221 = pnand %p219, %p220
      %p222 = pneg %p221
      // Predicated region
      $region25: #{tpu_custom_call.1} parent=5 // pred_check
        _
      $region26: #{tpu_custom_call.1} parent=5 // pred_check_branch
        %224 = sbr.rel (%p221) target = $region28
      $region27: #{tpu_custom_call.1} parent=5 // pred_region
        %s225 = ssub.s32 %s21, 1
        %s226 = sand.u32 %s48, 1
        %s227 = scalar_lea.sflag [#allocation3], %s226
        %s228 = sand.u32 %s48, 1
        %s229 = smul.addr %s228, 8
        %s230 = scalar_lea.vmem [#allocation2], %s229
        // Predicated region
        $region29: #{tpu_custom_call.1} parent=27 // pred_check
          %p231 = pneg %p61
        $region30: #{tpu_custom_call.1} parent=27 // pred_check_branch
          %233 = sbr.rel (%p231) target = $region32
        $region31: #{tpu_custom_call.1} parent=27 // pred_region
          %235 = dma.done %s227, 128
        $region32: #{tpu_custom_call.1} parent=27 // pred_fallthru
          _
        // Predicated region
        $region33: #{tpu_custom_call.1} parent=27 // pred_check
          %p236 = pneg %p82
        $region34: #{tpu_custom_call.1} parent=27 // pred_check_branch
          %238 = sbr.rel (%p236) target = $region36
        $region35: #{tpu_custom_call.1} parent=27 // pred_region
          %240 = dma.done [#allocation6], 512
        $region36: #{tpu_custom_call.1} parent=27 // pred_fallthru
          _
        %s241 = sand.u32 %s48, 1
        %s242 = scalar_lea.sflag [#allocation3], %s241
        %s243 = sand.u32 %s48, 1
        %s244 = smul.addr %s243, 8
        %s245 = scalar_lea.vmem [#allocation2], %s244
        %p246 = pneg %p61
        %p247 = pneg %p58
        %p248 = pneg %p82
        %p249 = pneg %p79
        %p250 = pneg %p110
        %p251 = pneg %p107
        %s252 = sand.u32 %s97, 1
        %s253 = scalar_lea.sflag [#allocation4], %s252
        %s254 = sand.u32 %s97, 1
        %s255 = smul.addr %s254, 32
        %s256 = scalar_lea.vmem [#allocation7], %s255
        %p257 = pneg %p138
        %p258 = pneg %p135
        %s259 = sand.u32 %s26, 1
        %s260 = scalar_lea.sflag [#allocation9], %s259
        %s261 = sand.u32 %s125, 1
        %s262 = smul.addr %s261, 32
        %s263 = scalar_lea.vmem [#allocation8], %s262
        %p264 = pneg %p166
        %p265 = pneg %p163
        %s266 = sand.u32 %s26, 1
        %s267 = scalar_lea.sflag [#allocation9], %s266
        %s268 = sand.u32 %s153, 1
        %s269 = smul.addr %s268, 32
        %s270 = scalar_lea.vmem [#allocation10], %s269
        %v271 = vld [vmem:[%s230] sm:$0xff]
        %v272 = vld [vmem:[#allocation5] sm:$0xff]
        %v273 = vld [vmem:[#allocation5 + $0x8] sm:$0xff]
        %v274 = vld [vmem:[#allocation5 + $0x10] sm:$0xff]
        %v275 = vld [vmem:[#allocation5 + $0x18] sm:$0xff]
        %vm276 = vcmask 261120
        %v278 = vsel %vm276, %v271, 0
        %280 = vmatpush.msra.mxu0 0.0
        %281 = vmatpush.msra.mxu0 0.0
        %282 = vmatpush.msra.mxu0 0.0
        %283 = vmatpush.msra.mxu0 0.0
        %284 = vmatpush.msra.mxu0 0.0
        %285 = vmatpush.msra.mxu0 0.0
        %286 = vmatpush.msra.mxu0 0.0
        %287 = vmatpush.msra.mxu0 0.0
        %288 = vmatpush.msra.mxu0 0.0
        %289 = vmatpush.msra.mxu0 0.0
        %290 = vmatpush.msra.mxu0 0.0
        %291 = vmatpush.msra.mxu0 0.0
        %292 = vmatpush.msra.mxu0 %v275
        %293 = vmatpush.msra.mxu0 %v274
        %294 = vmatpush.msra.mxu0 %v273
        %295 = vmatpush.msra.mxu0 %v272
        %296 = vmatmul.f32.gmra.mxu0 %v278
        %v297 = vpop.f32.mrf.mxu0
        %v298 = vadd.f32 0.0, %v297
        %299 = vdwg.mxu0
        %v300 = vmul.f32 %v298, 0.35355338
        %vm301 = vcmask 64512
        %302 = vst.msk [vmem:[%s256] sm:$0xff] %vm301, %v300
        %304 = vrot.lane.b32.xlu0 %v298, 96
        %v305 = vpop.permute.xlu0 %304
        %307 = vst.msk [vmem:[%s263] sm:$0xff] %vm301, %v305
        %308 = vrot.lane.b32.xlu0 %v298, 64
        %v309 = vpop.permute.xlu0 %308
        %311 = vst.msk [vmem:[%s270] sm:$0xff] %vm301, %v309
        %313 = vrot.lane.b32.xlu0 %v300, 120
        %v314 = vpop.permute.xlu0 %313
        %s316 = scalar_lea.vmem %s256, 8 [#allocation7]
        %317 = vst.msk [vmem:[%s316] sm:$0xff] %vm301, %v314
        %318 = vrot.lane.b32.xlu0 %v298, 88
        %v319 = vpop.permute.xlu0 %318
        %s321 = scalar_lea.vmem %s263, 8 [#allocation8]
        %322 = vst.msk [vmem:[%s321] sm:$0xff] %vm301, %v319
        %323 = vrot.lane.b32.xlu0 %v298, 56
        %v324 = vpop.permute.xlu0 %323
        %s326 = scalar_lea.vmem %s270, 8 [#allocation10]
        %327 = vst.msk [vmem:[%s326] sm:$0xff] %vm301, %v324
        %328 = vrot.lane.b32.xlu0 %v300, 112
        %v329 = vpop.permute.xlu0 %328
        %s331 = scalar_lea.vmem %s256, 16 [#allocation7]
        %332 = vst.msk [vmem:[%s331] sm:$0xff] %vm301, %v329
        %333 = vrot.lane.b32.xlu0 %v298, 80
        %v334 = vpop.permute.xlu0 %333
        %s336 = scalar_lea.vmem %s263, 16 [#allocation8]
        %337 = vst.msk [vmem:[%s336] sm:$0xff] %vm301, %v334
        %338 = vrot.lane.b32.xlu0 %v298, 48
        %v339 = vpop.permute.xlu0 %338
        %s341 = scalar_lea.vmem %s270, 16 [#allocation10]
        %342 = vst.msk [vmem:[%s341] sm:$0xff] %vm301, %v339
        %343 = vrot.lane.b32.xlu0 %v300, 104
        %v344 = vpop.permute.xlu0 %343
        %s346 = scalar_lea.vmem %s256, 24 [#allocation7]
        %347 = vst.msk [vmem:[%s346] sm:$0xff] %vm301, %v344
        %348 = vrot.lane.b32.xlu0 %v298, 72
        %v349 = vpop.permute.xlu0 %348
        %s351 = scalar_lea.vmem %s263, 24 [#allocation8]
        %352 = vst.msk [vmem:[%s351] sm:$0xff] %vm301, %v349
        %353 = vrot.lane.b32.xlu0 %v298, 40
        %v354 = vpop.permute.xlu0 %353
        %s356 = scalar_lea.vmem %s270, 24 [#allocation10]
        %357 = vst.msk [vmem:[%s356] sm:$0xff] %vm301, %v354
        %s358 = sand.u32 %s97, 1
        %s359 = scalar_lea.sflag [#allocation4], %s358
        %s360 = sand.u32 %s97, 1
        %s361 = smul.addr %s360, 32
        %s362 = scalar_lea.vmem [#allocation7], %s361
        %s363 = sand.u32 %s26, 1
        %s364 = scalar_lea.sflag [#allocation9], %s363
        %s365 = sand.u32 %s125, 1
        %s366 = smul.addr %s365, 32
        %s367 = scalar_lea.vmem [#allocation8], %s366
        %s368 = sand.u32 %s26, 1
        %s369 = scalar_lea.sflag [#allocation9], %s368
        %s370 = sand.u32 %s153, 1
        %s371 = smul.addr %s370, 32
        %s372 = scalar_lea.vmem [#allocation10], %s371
        // Predicated region
        $region37: #{tpu_custom_call.1} parent=27 // pred_check
          %p373 = pneg %p107
        $region38: #{tpu_custom_call.1} parent=27 // pred_check_branch
          %375 = sbr.rel (%p373) target = $region40
        $region39: #{tpu_custom_call.1} parent=27 // pred_region
          %377 = vsyncadd %s359, 0
          %s378 = smul.addr %s30, 4
          %s379 = sadd.s32 %s31, %s378
          %s380 = smul.addr %s379, 8
          %s381 = scalar_lea.hbm %s2, %s380
          %s382 = sshll.u32 %s362, 4
          %s383 = int_to_ptr.vmem [resolvable:$true] %s382
          %s384 = sshll.u32 %s381, 4
          %s385 = int_to_ptr.hbm [resolvable:$true] %s384
          %390 = dma.vmem_to_hbm [thread:$0]  %s383, 512, %s385, %s359, 128, 128, 8
        $region40: #{tpu_custom_call.1} parent=27 // pred_fallthru
          _
        // Predicated region
        $region41: #{tpu_custom_call.1} parent=27 // pred_check
          %p391 = pneg %p135
        $region42: #{tpu_custom_call.1} parent=27 // pred_check_branch
          %393 = sbr.rel (%p391) target = $region44
        $region43: #{tpu_custom_call.1} parent=27 // pred_region
          %395 = vsyncadd %s364, 0
          %s396 = smul.addr %s30, 4
          %s397 = sadd.s32 %s31, %s396
          %s398 = smul.addr %s397, 8
          %s399 = scalar_lea.hbm %s3, %s398
          %s400 = sshll.u32 %s367, 4
          %s401 = int_to_ptr.vmem [resolvable:$true] %s400
          %s402 = sshll.u32 %s399, 4
          %s403 = int_to_ptr.hbm [resolvable:$true] %s402
          %408 = dma.vmem_to_hbm [thread:$0]  %s401, 512, %s403, %s364, 128, 128, 8
        $region44: #{tpu_custom_call.1} parent=27 // pred_fallthru
          _
        // Predicated region
        $region45: #{tpu_custom_call.1} parent=27 // pred_check
          %p409 = pneg %p163
        $region46: #{tpu_custom_call.1} parent=27 // pred_check_branch
          %411 = sbr.rel (%p409) target = $region48
        $region47: #{tpu_custom_call.1} parent=27 // pred_region
          %413 = vsyncadd %s369, 0
          %s414 = smul.addr %s30, 4
          %s415 = sadd.s32 %s31, %s414
          %s416 = smul.addr %s415, 8
          %s417 = scalar_lea.hbm %s4, %s416
          %s418 = sshll.u32 %s372, 4
          %s419 = int_to_ptr.vmem [resolvable:$true] %s418
          %s420 = sshll.u32 %s417, 4
          %s421 = int_to_ptr.hbm [resolvable:$true] %s420
          %426 = dma.vmem_to_hbm [thread:$0]  %s419, 512, %s421, %s369, 128, 128, 8
        $region48: #{tpu_custom_call.1} parent=27 // pred_fallthru
          _
      $region28: #{tpu_custom_call.1} parent=5 // pred_fallthru
        _
      %p427 = scmp.le.s32.totalorder 2, %s21
      // Predicated region
      $region49: #{tpu_custom_call.1} parent=5 // pred_check
        %p428 = pneg %p427
      $region50: #{tpu_custom_call.1} parent=5 // pred_check_branch
        %430 = sbr.rel (%p428) target = $region52
      $region51: #{tpu_custom_call.1} parent=5 // pred_region
        %s431 = ssub.s32 %s21, 2
        // Predicated region
        $region53: #{tpu_custom_call.1} parent=51 // pred_check
          %p432 = pneg %p113
        $region54: #{tpu_custom_call.1} parent=51 // pred_check_branch
          %434 = sbr.rel (%p432) target = $region56
        $region55: #{tpu_custom_call.1} parent=51 // pred_region
          %s435 = sand.u32 %s98, 1
          %s436 = scalar_lea.sflag [#allocation4], %s435
          %s437 = sand.u32 %s98, 1
          %s438 = smul.addr %s437, 32
          %s439 = scalar_lea.vmem [#allocation7], %s438
          %441 = dma.done %s436, 512
        $region56: #{tpu_custom_call.1} parent=51 // pred_fallthru
          _
        // Predicated region
        $region57: #{tpu_custom_call.1} parent=51 // pred_check
          %p442 = pneg %p141
        $region58: #{tpu_custom_call.1} parent=51 // pred_check_branch
          %444 = sbr.rel (%p442) target = $region60
        $region59: #{tpu_custom_call.1} parent=51 // pred_region
          %s445 = sand.u32 %s27, 1
          %s446 = scalar_lea.sflag [#allocation9], %s445
          %s447 = sand.u32 %s126, 1
          %s448 = smul.addr %s447, 32
          %s449 = scalar_lea.vmem [#allocation8], %s448
          %451 = dma.done %s446, 512
        $region60: #{tpu_custom_call.1} parent=51 // pred_fallthru
          _
        // Predicated region
        $region61: #{tpu_custom_call.1} parent=51 // pred_check
          %p452 = pneg %p169
        $region62: #{tpu_custom_call.1} parent=51 // pred_check_branch
          %454 = sbr.rel (%p452) target = $region64
        $region63: #{tpu_custom_call.1} parent=51 // pred_region
          %s455 = sand.u32 %s27, 1
          %s456 = scalar_lea.sflag [#allocation9], %s455
          %s457 = sand.u32 %s154, 1
          %s458 = smul.addr %s457, 32
          %s459 = scalar_lea.vmem [#allocation10], %s458
          %461 = dma.done %s456, 512
        $region64: #{tpu_custom_call.1} parent=51 // pred_fallthru
          _
      $region52: #{tpu_custom_call.1} parent=5 // pred_fallthru
        _
    $region6: #{tpu_custom_call.1} parent=1 // loop_footer
      %s25 = sadd.s32 1, %s21
    $region7: #{tpu_custom_call.1} parent=1 // loop_footer_branch
      %20 = sbr.rel target = $region3
    $region8: #{tpu_custom_call.1} parent=1 // loop_exit
      _
    %462 = vsyncpa [#allocation3], 1
    %s463 = scalar_lea.sflag [#allocation3], 1
    %464 = vsyncpa %s463, 1
    %465 = vsyncpa [#allocation6], 1
    %466 = vsyncpa [#allocation4], 1
    %s467 = scalar_lea.sflag [#allocation4], 1
    %468 = vsyncpa %s467, 1
    %469 = vsyncpa [#allocation9], 1
    %s470 = scalar_lea.sflag [#allocation9], 1
    %471 = vsyncpa %s470, 1

// kernel: tpu_custom_call.1
$region0: #{tpu_custom_call.1}
  #allocation0 [shape = 'u32[]', space=smem, size = 0x4, offset = 0x4, fixed_abs, tag = 'smem constant byte address 0x4 - core index']
  #allocation1 [shape = 'u32[72,128]{1,0:T(1,128)}', space=vmem, size = 0x9000, scoped, tag = 'internal scratch']
  %s0 = inlined_call_operand.hbm [shape: f32[2,8,32], index: 0, kind: input, shape index: {}]
  %s1 = inlined_call_operand.hbm [shape: f32[32,96], index: 1, kind: input, shape index: {}]
  %s2 = inlined_call_operand.hbm [shape: f32[2,4,8,8], index: 2, kind: output, shape index: {0}]
  %s3 = inlined_call_operand.hbm [shape: f32[2,4,8,8], index: 3, kind: output, shape index: {1}]
  %s4 = inlined_call_operand.hbm [shape: f32[2,4,8,8], index: 4, kind: output, shape index: {2}]
  %5 = xla_tuple %s2, %s3, %s4
  %s6 = sld [smem:[#allocation0]]
  $region65: #{tpu_custom_call.1} parent=0
    _
  %s8 = ssub.s32 1, %s6
  %s9 = scalar_select 0, %s8, %s6
  $region1: #{tpu_custom_call.1} parent=0
    #allocation2 [shape = 'u8[8192]{0}', space=vmem, size = 0x2000, scoped, tag = 'input window, operand 0']
    #allocation3 [shape = 's32[2]{0}', space=sflag, size = 0x8, scoped, tag = 'scoped memory for tpu_custom_call.1']
    #allocation4 [shape = 's32[2]{0}', space=sflag, size = 0x8, scoped, tag = 'scoped memory for tpu_custom_call.1']
    #allocation5 [shape = 'u8[16384]{0}', space=vmem, size = 0x4000, scoped, tag = 'input window, operand 1, single buffered']
    #allocation6 [shape = 's32[1]{0}', space=sflag, size = 0x4, scoped, tag = 'scoped memory for tpu_custom_call.1']
    #allocation7 [shape = 'u8[32768]{0}', space=vmem, size = 0x8000, scoped, tag = 'output window, operand 0']
    #allocation8 [shape = 'u8[32768]{0}', space=vmem, size = 0x8000, scoped, tag = 'output window, operand 1']
    #allocation9 [shape = 's32[2]{0}', space=sflag, size = 0x8, scoped, tag = 'scoped memory for tpu_custom_call.1']
    #allocation10 [shape = 'u8[32768]{0}', space=vmem, size = 0x8000, scoped, tag = 'output window, operand 2']
    %10 = vsyncpa [#allocation3], 0
    %s11 = scalar_lea.sflag [#allocation3], 1
    %12 = vsyncpa %s11, 0
    %13 = vsyncpa [#allocation6], 0
    %14 = vsyncpa [#allocation4], 0
    %s15 = scalar_lea.sflag [#allocation4], 1
    %16 = vsyncpa %s15, 0
    %17 = vsyncpa [#allocation9], 0
    %s18 = scalar_lea.sflag [#allocation9], 1
    %19 = vsyncpa %s18, 0
    loop: start=0, step=1, limit=4
    $region2: #{tpu_custom_call.1} parent=1 // loop_pre_header
      _
    $region3: #{tpu_custom_call.1} parent=1 // loop_header
      %s21 = sphi 0, %s25
      %p22 = scmp.ge.s32.totalorder %s21, 4
      %s28 = sphi 0, %s40
      %s29 = sphi 0, %s36
      %s30 = sphi 0, %s28
      %s31 = sphi 0, %s29
      %s32 = sphi 0, %s30
      %s33 = sphi 0, %s31
      %s45 = sphi 0, %s47
      %s48 = sphi 0, %s45
      %s49 = sphi 0, %s48
      %s65 = sphi 0, %s49
      %s69 = sphi 0, %s69
      %s71 = sphi 0, %s69
      %s72 = sphi 0, %s71
      %s86 = sphi 0, %s72
      %s94 = sphi 0, %s96
      %s97 = sphi 0, %s94
      %s98 = sphi 0, %s97
      %s114 = sphi 0, %s98
      %s122 = sphi 0, %s124
      %s125 = sphi 0, %s122
      %s126 = sphi 0, %s125
      %s142 = sphi 0, %s126
      %s150 = sphi 0, %s152
      %s153 = sphi 0, %s150
      %s154 = sphi 0, %s153
      %s170 = sphi 0, %s154
    $region4: #{tpu_custom_call.1} parent=1 // loop_header_branch
      %24 = sbr.rel (%p22) target = $region8
    $region5: #{tpu_custom_call.1} parent=1 // loop_body
      %s26 = ssub.s32 %s21, 1
      %s27 = ssub.s32 %s21, 2
      %s34 = sadd.s32 1, %s29
      %p35 = scmp.ge.s32.totalorder %s34, 1
      %s36 = scalar_select %p35, 0, %s34
      %s37 = sadd.s32 1, %s28
      %s38 = scalar_select %p35, %s37, %s28
      %p39 = scmp.ge.s32.totalorder %s38, 2
      %s40 = scalar_select %p39, 0, %s38
      %s41 = ssub.s32 %s28, %s40
      %s42 = ssub.s32 %s29, %s36
      %s43 = sor.u32 %s41, %s42
      %p44 = scmp.eq.s32.totalorder %s43, 0
      %s46 = sadd.s32 %s45, 1
      %s47 = scalar_select %p44, %s45, %s46
      %p50 = pneg %p44
      %p51 = scmp.eq.s32.totalorder %s21, 1
      %p52 = por %p50, %p51
      %p53 = scmp.ne.s32.totalorder %s45, %s48
      %p54 = scmp.eq.s32.totalorder %s21, 0
      %p55 = por %p53, %p54
      %p56 = scmp.ne.s32.totalorder %s45, %s48
      %p57 = scmp.eq.s32.totalorder %s26, 1
      %p58 = por %p56, %p57
      %p59 = scmp.ne.s32.totalorder %s48, %s49
      %p60 = scmp.eq.s32.totalorder %s26, 0
      %p61 = por %p59, %p60
      %p62 = scmp.ne.s32.totalorder %s48, %s49
      %p63 = scmp.eq.s32.totalorder %s27, 1
      %p64 = por %p62, %p63
      %p66 = scmp.ne.s32.totalorder %s49, %s65
      %p67 = scmp.eq.s32.totalorder %s27, 0
      %p68 = por %p66, %p67
      %s70 = sadd.s32 %s69, 1
      %p73 = scmp.eq.s32.totalorder %s21, 1
      %p74 = scmp.ne.s32.totalorder %s69, %s71
      %p75 = scmp.eq.s32.totalorder %s21, 0
      %p76 = por %p74, %p75
      %p77 = scmp.ne.s32.totalorder %s69, %s71
      %p78 = scmp.eq.s32.totalorder %s26, 1
      %p79 = por %p77, %p78
      %p80 = scmp.ne.s32.totalorder %s71, %s72
      %p81 = scmp.eq.s32.totalorder %s26, 0
      %p82 = por %p80, %p81
      %p83 = scmp.ne.s32.totalorder %s71, %s72
      %p84 = scmp.eq.s32.totalorder %s27, 1
      %p85 = por %p83, %p84
      %p87 = scmp.ne.s32.totalorder %s72, %s86
      %p88 = scmp.eq.s32.totalorder %s27, 0
      %p89 = por %p87, %p88
      %s90 = ssub.s32 %s28, %s40
      %s91 = ssub.s32 %s29, %s36
      %s92 = sor.u32 %s90, %s91
      %p93 = scmp.eq.s32.totalorder %s92, 0
      %s95 = sadd.s32 %s94, 1
      %s96 = scalar_select %p93, %s94, %s95
      %p99 = pneg %p93
      %p100 = scmp.eq.s32.totalorder %s21, 1
      %p101 = por %p99, %p100
      %p102 = scmp.ne.s32.totalorder %s94, %s97
      %p103 = scmp.eq.s32.totalorder %s21, 0
      %p104 = por %p102, %p103
      %p105 = scmp.ne.s32.totalorder %s94, %s97
      %p106 = scmp.eq.s32.totalorder %s26, 1
      %p107 = por %p105, %p106
      %p108 = scmp.ne.s32.totalorder %s97, %s98
      %p109 = scmp.eq.s32.totalorder %s26, 0
      %p110 = por %p108, %p109
      %p111 = scmp.ne.s32.totalorder %s97, %s98
      %p112 = scmp.eq.s32.totalorder %s27, 1
      %p113 = por %p111, %p112
      %p115 = scmp.ne.s32.totalorder %s98, %s114
      %p116 = scmp.eq.s32.totalorder %s27, 0
      %p117 = por %p115, %p116
      %s118 = ssub.s32 %s28, %s40
      %s119 = ssub.s32 %s29, %s36
      %s120 = sor.u32 %s118, %s119
      %p121 = scmp.eq.s32.totalorder %s120, 0
      %s123 = sadd.s32 %s122, 1
      %s124 = scalar_select %p121, %s122, %s123
      %p127 = pneg %p121
      %p128 = scmp.eq.s32.totalorder %s21, 1
      %p129 = por %p127, %p128
      %p130 = scmp.ne.s32.totalorder %s122, %s125
      %p131 = scmp.eq.s32.totalorder %s21, 0
      %p132 = por %p130, %p131
      %p133 = scmp.ne.s32.totalorder %s122, %s125
      %p134 = scmp.eq.s32.totalorder %s26, 1
      %p135 = por %p133, %p134
      %p136 = scmp.ne.s32.totalorder %s125, %s126
      %p137 = scmp.eq.s32.totalorder %s26, 0
      %p138 = por %p136, %p137
      %p139 = scmp.ne.s32.totalorder %s125, %s126
      %p140 = scmp.eq.s32.totalorder %s27, 1
      %p141 = por %p139, %p140
      %p143 = scmp.ne.s32.totalorder %s126, %s142
      %p144 = scmp.eq.s32.totalorder %s27, 0
      %p145 = por %p143, %p144
      %s146 = ssub.s32 %s28, %s40
      %s147 = ssub.s32 %s29, %s36
      %s148 = sor.u32 %s146, %s147
      %p149 = scmp.eq.s32.totalorder %s148, 0
      %s151 = sadd.s32 %s150, 1
      %s152 = scalar_select %p149, %s150, %s151
      %p155 = pneg %p149
      %p156 = scmp.eq.s32.totalorder %s21, 1
      %p157 = por %p155, %p156
      %p158 = scmp.ne.s32.totalorder %s150, %s153
      %p159 = scmp.eq.s32.totalorder %s21, 0
      %p160 = por %p158, %p159
      %p161 = scmp.ne.s32.totalorder %s150, %s153
      %p162 = scmp.eq.s32.totalorder %s26, 1
      %p163 = por %p161, %p162
      %p164 = scmp.ne.s32.totalorder %s153, %s154
      %p165 = scmp.eq.s32.totalorder %s26, 0
      %p166 = por %p164, %p165
      %p167 = scmp.ne.s32.totalorder %s153, %s154
      %p168 = scmp.eq.s32.totalorder %s27, 1
      %p169 = por %p167, %p168
      %p171 = scmp.ne.s32.totalorder %s154, %s170
      %p172 = scmp.eq.s32.totalorder %s27, 0
      %p173 = por %p171, %p172
      %p174 = scmp.le.s32.totalorder 1, %s21
      %p175 = scmp.lt.s32.totalorder %s21, 3
      %p176 = pnand %p174, %p175
      %p177 = pneg %p176
      // Predicated region
      $region9: #{tpu_custom_call.1} parent=5 // pred_check
        _
      $region10: #{tpu_custom_call.1} parent=5 // pred_check_branch
        %179 = sbr.rel (%p176) target = $region12
      $region11: #{tpu_custom_call.1} parent=5 // pred_region
        %s180 = ssub.s32 %s21, 1
        // Predicated region
        $region13: #{tpu_custom_call.1} parent=11 // pred_check
          %p181 = pneg %p82
        $region14: #{tpu_custom_call.1} parent=11 // pred_check_branch
          %183 = sbr.rel (%p181) target = $region16
        $region15: #{tpu_custom_call.1} parent=11 // pred_region
          %185 = vsyncadd [#allocation6], 0
          %s186 = sshll.u32 %s1, 4
          %s187 = int_to_ptr.hbm [resolvable:$true] %s186
          %s188 = sshll.u32 [#allocation5], 4
          %s189 = int_to_ptr.vmem [resolvable:$true] %s188
          %194 = dma.hbm_to_vmem [thread:$0]  %s187, 512, %s189, [#allocation6], 128, 128, 8
        $region16: #{tpu_custom_call.1} parent=11 // pred_fallthru
          _
      $region12: #{tpu_custom_call.1} parent=5 // pred_fallthru
        _
      %p195 = scmp.lt.s32.totalorder %s21, 2
      // Predicated region
      $region17: #{tpu_custom_call.1} parent=5 // pred_check
        %p196 = pneg %p195
      $region18: #{tpu_custom_call.1} parent=5 // pred_check_branch
        %198 = sbr.rel (%p196) target = $region20
      $region19: #{tpu_custom_call.1} parent=5 // pred_region
        // Predicated region
        $region21: #{tpu_custom_call.1} parent=19 // pred_check
          %p199 = pneg %p55
        $region22: #{tpu_custom_call.1} parent=19 // pred_check_branch
          %201 = sbr.rel (%p199) target = $region24
        $region23: #{tpu_custom_call.1} parent=19 // pred_region
          %s202 = sand.u32 %s45, 1
          %s203 = scalar_lea.sflag [#allocation3], %s202
          %s204 = sand.u32 %s45, 1
          %s205 = smul.addr %s204, 8
          %s206 = scalar_lea.vmem [#allocation2], %s205
          %208 = vsyncadd %s203, 0
          %s209 = sadd.s32 %s29, %s28
          %s210 = smul.addr %s209, 8
          %s211 = scalar_lea.hbm %s0, %s210
          %s213 = sshll.u32 %s211, 4
          %s214 = int_to_ptr.hbm [resolvable:$true] %s213
          %s215 = sshll.u32 %s206, 4
          %s216 = int_to_ptr.vmem [resolvable:$true] %s215
          %218 = dma.hbm_to_vmem [thread:$0]  %s214, 128, %s216, %s203
        $region24: #{tpu_custom_call.1} parent=19 // pred_fallthru
          _
      $region20: #{tpu_custom_call.1} parent=5 // pred_fallthru
        _
      %p219 = scmp.le.s32.totalorder 1, %s21
      %p220 = scmp.lt.s32.totalorder %s21, 3
      %p221 = pnand %p219, %p220
      %p222 = pneg %p221
      // Predicated region
      $region25: #{tpu_custom_call.1} parent=5 // pred_check
        _
      $region26: #{tpu_custom_call.1} parent=5 // pred_check_branch
        %224 = sbr.rel (%p221) target = $region28
      $region27: #{tpu_custom_call.1} parent=5 // pred_region
        %s225 = ssub.s32 %s21, 1
        %s226 = sand.u32 %s48, 1
        %s227 = scalar_lea.sflag [#allocation3], %s226
        %s228 = sand.u32 %s48, 1
        %s229 = smul.addr %s228, 8
        %s230 = scalar_lea.vmem [#allocation2], %s229
        // Predicated region
        $region29: #{tpu_custom_call.1} parent=27 // pred_check
          %p231 = pneg %p61
        $region30: #{tpu_custom_call.1} parent=27 // pred_check_branch
          %233 = sbr.rel (%p231) target = $region32
        $region31: #{tpu_custom_call.1} parent=27 // pred_region
          %235 = dma.done %s227, 128
        $region32: #{tpu_custom_call.1} parent=27 // pred_fallthru
          _
        // Predicated region
        $region33: #{tpu_custom_call.1} parent=27 // pred_check
          %p236 = pneg %p82
        $region34: #{tpu_custom_call.1} parent=27 // pred_check_branch
          %238 = sbr.rel (%p236) target = $region36
        $region35: #{tpu_custom_call.1} parent=27 // pred_region
          %240 = dma.done [#allocation6], 512
        $region36: #{tpu_custom_call.1} parent=27 // pred_fallthru
          _
        %s241 = sand.u32 %s48, 1
        %s242 = scalar_lea.sflag [#allocation3], %s241
        %s243 = sand.u32 %s48, 1
        %s244 = smul.addr %s243, 8
        %s245 = scalar_lea.vmem [#allocation2], %s244
        %p246 = pneg %p61
        %p247 = pneg %p58
        %p248 = pneg %p82
        %p249 = pneg %p79
        %p250 = pneg %p110
        %p251 = pneg %p107
        %s252 = sand.u32 %s97, 1
        %s253 = scalar_lea.sflag [#allocation4], %s252
        %s254 = sand.u32 %s97, 1
        %s255 = smul.addr %s254, 32
        %s256 = scalar_lea.vmem [#allocation7], %s255
        %p257 = pneg %p138
        %p258 = pneg %p135
        %s259 = sand.u32 %s26, 1
        %s260 = scalar_lea.sflag [#allocation9], %s259
        %s261 = sand.u32 %s125, 1
        %s262 = smul.addr %s261, 32
        %s263 = scalar_lea.vmem [#allocation8], %s262
        %p264 = pneg %p166
        %p265 = pneg %p163
        %s266 = sand.u32 %s26, 1
        %s267 = scalar_lea.sflag [#allocation9], %s266
        %s268 = sand.u32 %s153, 1
        %s269 = smul.addr %s268, 32
        %s270 = scalar_lea.vmem [#allocation10], %s269
        %v271 = vld [vmem:[%s230] sm:$0xff]
        %v272 = vld [vmem:[#allocation5] sm:$0xff]
        %v273 = vld [vmem:[#allocation5 + $0x8] sm:$0xff]
        %v274 = vld [vmem:[#allocation5 + $0x10] sm:$0xff]
        %v275 = vld [vmem:[#allocation5 + $0x18] sm:$0xff]
        %vm276 = vcmask 261120
        %v278 = vsel %vm276, %v271, 0
        %280 = vmatpush.msra.mxu0 0.0
        %281 = vmatpush.msra.mxu0 0.0
        %282 = vmatpush.msra.mxu0 0.0
        %283 = vmatpush.msra.mxu0 0.0
        %284 = vmatpush.msra.mxu0 0.0
        %285 = vmatpush.msra.mxu0 0.0
        %286 = vmatpush.msra.mxu0 0.0
        %287 = vmatpush.msra.mxu0 0.0
        %288 = vmatpush.msra.mxu0 0.0
        %289 = vmatpush.msra.mxu0 0.0
        %290 = vmatpush.msra.mxu0 0.0
        %291 = vmatpush.msra.mxu0 0.0
        %292 = vmatpush.msra.mxu0 %v275
        %293 = vmatpush.msra.mxu0 %v274
        %294 = vmatpush.msra.mxu0 %v273
        %295 = vmatpush.msra.mxu0 %v272
        %296 = vmatmul.f32.gmra.mxu0 %v278
        %v297 = vpop.f32.mrf.mxu0
        %v298 = vadd.f32 0.0, %v297
        %299 = vdwg.mxu0
        %v300 = vmul.f32 %v298, 0.35355338
        %vm301 = vcmask 64512
        %302 = vst.msk [vmem:[%s256] sm:$0xff] %vm301, %v300
        %304 = vrot.lane.b32.xlu0 %v298, 96
        %v305 = vpop.permute.xlu0 %304
        %307 = vst.msk [vmem:[%s263] sm:$0xff] %vm301, %v305
        %308 = vrot.lane.b32.xlu0 %v298, 64
        %v309 = vpop.permute.xlu0 %308
        %311 = vst.msk [vmem:[%s270] sm:$0xff] %vm301, %v309
        %313 = vrot.lane.b32.xlu0 %v300, 120
        %v314 = vpop.permute.xlu0 %313
        %s316 = scalar_lea.vmem %s256, 8 [#allocation7]
        %317 = vst.msk [vmem:[%s316] sm:$0xff] %vm301, %v314
        %318 = vrot.lane.b32.xlu0 %v298, 88
        %v319 = vpop.permute.xlu0 %318
        %s321 = scalar_lea.vmem %s263, 8 [#allocation8]
        %322 = vst.msk [vmem:[%s321] sm:$0xff] %vm301, %v319
        %323 = vrot.lane.b32.xlu0 %v298, 56
        %v324 = vpop.permute.xlu0 %323
        %s326 = scalar_lea.vmem %s270, 8 [#allocation10]
        %327 = vst.msk [vmem:[%s326] sm:$0xff] %vm301, %v324
        %328 = vrot.lane.b32.xlu0 %v300, 112
        %v329 = vpop.permute.xlu0 %328
        %s331 = scalar_lea.vmem %s256, 16 [#allocation7]
        %332 = vst.msk [vmem:[%s331] sm:$0xff] %vm301, %v329
        %333 = vrot.lane.b32.xlu0 %v298, 80
        %v334 = vpop.permute.xlu0 %333
        %s336 = scalar_lea.vmem %s263, 16 [#allocation8]
        %337 = vst.msk [vmem:[%s336] sm:$0xff] %vm301, %v334
        %338 = vrot.lane.b32.xlu0 %v298, 48
        %v339 = vpop.permute.xlu0 %338
        %s341 = scalar_lea.vmem %s270, 16 [#allocation10]
        %342 = vst.msk [vmem:[%s341] sm:$0xff] %vm301, %v339
        %343 = vrot.lane.b32.xlu0 %v300, 104
        %v344 = vpop.permute.xlu0 %343
        %s346 = scalar_lea.vmem %s256, 24 [#allocation7]
        %347 = vst.msk [vmem:[%s346] sm:$0xff] %vm301, %v344
        %348 = vrot.lane.b32.xlu0 %v298, 72
        %v349 = vpop.permute.xlu0 %348
        %s351 = scalar_lea.vmem %s263, 24 [#allocation8]
        %352 = vst.msk [vmem:[%s351] sm:$0xff] %vm301, %v349
        %353 = vrot.lane.b32.xlu0 %v298, 40
        %v354 = vpop.permute.xlu0 %353
        %s356 = scalar_lea.vmem %s270, 24 [#allocation10]
        %357 = vst.msk [vmem:[%s356] sm:$0xff] %vm301, %v354
        %s358 = sand.u32 %s97, 1
        %s359 = scalar_lea.sflag [#allocation4], %s358
        %s360 = sand.u32 %s97, 1
        %s361 = smul.addr %s360, 32
        %s362 = scalar_lea.vmem [#allocation7], %s361
        %s363 = sand.u32 %s26, 1
        %s364 = scalar_lea.sflag [#allocation9], %s363
        %s365 = sand.u32 %s125, 1
        %s366 = smul.addr %s365, 32
        %s367 = scalar_lea.vmem [#allocation8], %s366
        %s368 = sand.u32 %s26, 1
        %s369 = scalar_lea.sflag [#allocation9], %s368
        %s370 = sand.u32 %s153, 1
        %s371 = smul.addr %s370, 32
        %s372 = scalar_lea.vmem [#allocation10], %s371
        // Predicated region
        $region37: #{tpu_custom_call.1} parent=27 // pred_check
          %p373 = pneg %p107
        $region38: #{tpu_custom_call.1} parent=27 // pred_check_branch
          %375 = sbr.rel (%p373) target = $region40
        $region39: #{tpu_custom_call.1} parent=27 // pred_region
          %377 = vsyncadd %s359, 0
          %s378 = smul.addr %s30, 4
          %s379 = sadd.s32 %s31, %s378
          %s380 = smul.addr %s379, 8
          %s381 = scalar_lea.hbm %s2, %s380
          %s382 = sshll.u32 %s362, 4
          %s383 = int_to_ptr.vmem [resolvable:$true] %s382
          %s384 = sshll.u32 %s381, 4
          %s385 = int_to_ptr.hbm [resolvable:$true] %s384
          %390 = dma.vmem_to_hbm [thread:$0]  %s383, 512, %s385, %s359, 128, 128, 8
        $region40: #{tpu_custom_call.1} parent=27 // pred_fallthru
          _
        // Predicated region
        $region41: #{tpu_custom_call.1} parent=27 // pred_check
          %p391 = pneg %p135
        $region42: #{tpu_custom_call.1} parent=27 // pred_check_branch
          %393 = sbr.rel (%p391) target = $region44
        $region43: #{tpu_custom_call.1} parent=27 // pred_region
          %395 = vsyncadd %s364, 0
          %s396 = smul.addr %s30, 4
          %s397 = sadd.s32 %s31, %s396
          %s398 = smul.addr %s397, 8
          %s399 = scalar_lea.hbm %s3, %s398
          %s400 = sshll.u32 %s367, 4
          %s401 = int_to_ptr.vmem [resolvable:$true] %s400
          %s402 = sshll.u32 %s399, 4
          %s403 = int_to_ptr.hbm [resolvable:$true] %s402
          %408 = dma.vmem_to_hbm [thread:$0]  %s401, 512, %s403, %s364, 128, 128, 8
        $region44: #{tpu_custom_call.1} parent=27 // pred_fallthru
          _
        // Predicated region
        $region45: #{tpu_custom_call.1} parent=27 // pred_check
          %p409 = pneg %p163
        $region46: #{tpu_custom_call.1} parent=27 // pred_check_branch
          %411 = sbr.rel (%p409) target = $region48
        $region47: #{tpu_custom_call.1} parent=27 // pred_region
          %413 = vsyncadd %s369, 0
          %s414 = smul.addr %s30, 4
          %s415 = sadd.s32 %s31, %s414
          %s416 = smul.addr %s415, 8
          %s417 = scalar_lea.hbm %s4, %s416
          %s418 = sshll.u32 %s372, 4
          %s419 = int_to_ptr.vmem [resolvable:$true] %s418
          %s420 = sshll.u32 %s417, 4
          %s421 = int_to_ptr.hbm [resolvable:$true] %s420
          %426 = dma.vmem_to_hbm [thread:$0]  %s419, 512, %s421, %s369, 128, 128, 8
        $region48: #{tpu_custom_call.1} parent=27 // pred_fallthru
          _
      $region28: #{tpu_custom_call.1} parent=5 // pred_fallthru
        _
      %p427 = scmp.le.s32.totalorder 2, %s21
      // Predicated region
      $region49: #{tpu_custom_call.1} parent=5 // pred_check
        %p428 = pneg %p427
      $region50: #{tpu_custom_call.1} parent=5 // pred_check_branch
        %430 = sbr.rel (%p428) target = $region52
      $region51: #{tpu_custom_call.1} parent=5 // pred_region
        %s431 = ssub.s32 %s21, 2
        // Predicated region
        $region53: #{tpu_custom_call.1} parent=51 // pred_check
          %p432 = pneg %p113
        $region54: #{tpu_custom_call.1} parent=51 // pred_check_branch
          %434 = sbr.rel (%p432) target = $region56
        $region55: #{tpu_custom_call.1} parent=51 // pred_region
          %s435 = sand.u32 %s98, 1
          %s436 = scalar_lea.sflag [#allocation4], %s435
          %s437 = sand.u32 %s98, 1
          %s438 = smul.addr %s437, 32
          %s439 = scalar_lea.vmem [#allocation7], %s438
          %441 = dma.done %s436, 512
        $region56: #{tpu_custom_call.1} parent=51 // pred_fallthru
          _
        // Predicated region
        $region57: #{tpu_custom_call.1} parent=51 // pred_check
          %p442 = pneg %p141
        $region58: #{tpu_custom_call.1} parent=51 // pred_check_branch
          %444 = sbr.rel (%p442) target = $region60
        $region59: #{tpu_custom_call.1} parent=51 // pred_region
          %s445 = sand.u32 %s27, 1
          %s446 = scalar_lea.sflag [#allocation9], %s445
          %s447 = sand.u32 %s126, 1
          %s448 = smul.addr %s447, 32
          %s449 = scalar_lea.vmem [#allocation8], %s448
          %451 = dma.done %s446, 512
        $region60: #{tpu_custom_call.1} parent=51 // pred_fallthru
          _
        // Predicated region
        $region61: #{tpu_custom_call.1} parent=51 // pred_check
          %p452 = pneg %p169
        $region62: #{tpu_custom_call.1} parent=51 // pred_check_branch
          %454 = sbr.rel (%p452) target = $region64
        $region63: #{tpu_custom_call.1} parent=51 // pred_region
          %s455 = sand.u32 %s27, 1
          %s456 = scalar_lea.sflag [#allocation9], %s455
          %s457 = sand.u32 %s154, 1
          %s458 = smul.addr %s457, 32
          %s459 = scalar_lea.vmem [#allocation10], %s458
          %461 = dma.done %s456, 512
        $region64: #{tpu_custom_call.1} parent=51 // pred_fallthru
          _
      $region52: #{tpu_custom_call.1} parent=5 // pred_fallthru
        _
    $region6: #{tpu_custom_call.1} parent=1 // loop_footer
      %s25 = sadd.s32 1, %s21
    $region7: #{tpu_custom_call.1} parent=1 // loop_footer_branch
      %20 = sbr.rel target = $region3
    $region8: #{tpu_custom_call.1} parent=1 // loop_exit
      _
    %462 = vsyncpa [#allocation3], 1
    %s463 = scalar_lea.sflag [#allocation3], 1
    %464 = vsyncpa %s463, 1
    %465 = vsyncpa [#allocation6], 1
    %466 = vsyncpa [#allocation4], 1
    %s467 = scalar_lea.sflag [#allocation4], 1
    %468 = vsyncpa %s467, 1
    %469 = vsyncpa [#allocation9], 1
    %s470 = scalar_lea.sflag [#allocation9], 1
    %471 = vsyncpa %s470, 1

</llo_original>
